<compile_context>
chip_gen: v7x
topology: tpu7x:2x2x1
jax: 0.10.0
libtpu: 0.0.40
codegen_flags: <defaults>
</compile_context>

<pallas_src>
import functools

import jax
import jax.numpy as jnp
from jax import lax
from jax.experimental import pallas as pl
from jax.experimental.pallas import tpu as pltpu

HIGHEST = lax.Precision.HIGHEST   # used only by the pure-JAX reference paths


# --------------------------------------------------------------------------- #
# Small helpers
# --------------------------------------------------------------------------- #
def _round_up(n, m):
    return (n + m - 1) // m * m


def _choose_tile(n, cap):
    """Largest tile <= cap (cap multiple of 8); tile is a multiple of 8."""
    return _round_up(n, 8) if n <= cap else cap


def _pad_dim(a, axis, size):
    pad = size - a.shape[axis]
    if pad == 0:
        return a
    cfg = [(0, 0)] * a.ndim
    cfg[axis] = (0, pad)
    return jnp.pad(a, cfg)


def _mosaic_params(sem, bytes_needed):
    """CompilerParams with an explicit scoped-VMEM budget (safe on v5e/v6e/v7x)."""
    lim = int(min(max(2 * bytes_needed + (2 << 20), 16 << 20), 64 << 20))
    return pltpu.CompilerParams(dimension_semantics=sem, vmem_limit_bytes=lim)


# --------------------------------------------------------------------------- #
# Pallas kernels
# --------------------------------------------------------------------------- #
def _linear_kernel(*refs, relu, has_res):
    """o = x @ w + b (+relu) (+res) on a (TN, Cin) node tile.  f32 accumulation."""
    if has_res:
        x_ref, w_ref, b_ref, r_ref, o_ref = refs
    else:
        x_ref, w_ref, b_ref, o_ref = refs
        r_ref = None
    y = jnp.dot(x_ref[...], w_ref[...], preferred_element_type=jnp.float32)
    y = y + b_ref[...]
    if relu:
        y = jnp.maximum(y, 0.0)
    if r_ref is not None:
        y = y + r_ref[...]
    o_ref[...] = y.astype(o_ref.dtype)


def _dist_kernel(xi_ref, xj_ref, o_ref):
    """Tile of the negative squared pairwise distance: 2 xi.xj - |xi|^2 - |xj|^2."""
    xi = xi_ref[0]                                            # (ti, C)
    xj = xj_ref[0]                                            # (tj, C)
    sq_i = jnp.sum(xi * xi, axis=-1, keepdims=True)           # (ti, 1)
    sq_j = jnp.sum(xj * xj, axis=-1, keepdims=True)           # (tj, 1)
    inner = lax.dot_general(xi, xj, (((1,), (1,)), ((), ())),
                            preferred_element_type=jnp.float32)  # (ti, tj)
    o_ref[0] = (2.0 * inner - sq_i - sq_j.T).astype(o_ref.dtype)


def _mrconv_kernel(x_ref, idx_ref, wx_ref, wm_ref, b_ref, o_ref, *, k, tn):
    """In-kernel neighbor gather (one-hot MXU) + max-relative + 1x1 conv + ReLU.

    x_ref   : (1, Np_pad, C)  full node slab of this batch (fetched once per batch)
    idx_ref : (1, tn, K)      kNN indices of this node tile
    """
    i = pl.program_id(1)
    x_full = x_ref[0]                                         # (Np_pad, C)
    np_pad = x_full.shape[0]
    start = pl.multiple_of(i * tn, tn)
    x_i = x_ref[0, pl.ds(start, tn), :].astype(jnp.float32)   # (tn, C)

    col = lax.broadcasted_iota(jnp.int32, (tn, np_pad), 1)
    xj_max = None
    for kk in range(k):                                       # K is small & static
        sel = (col == idx_ref[0, :, kk:kk + 1]).astype(x_full.dtype)  # (tn, Np_pad)
        g = jnp.dot(sel, x_full, preferred_element_type=jnp.float32)  # exact gather
        xj_max = g if xj_max is None else jnp.maximum(xj_max, g)
    m = xj_max - x_i                                          # max_k(x_j - x_i)

    # TODO(synk): the two C-deep dots could be fused into one 2C-deep matmul, but
    #             that needs a lane-concat at a non-128-aligned offset; with the
    #             in-kernel gather the K Np-deep matmuls dominate MXU work anyway.
    y = jnp.dot(x_i, wx_ref[...], preferred_element_type=jnp.float32)
    y = y + jnp.dot(m, wm_ref[...], preferred_element_type=jnp.float32)
    y = y + b_ref[...]
    o_ref[0] = jnp.maximum(y, 0.0).astype(o_ref.dtype)


# --------------------------------------------------------------------------- #
# Pallas wrappers (with plain-JAX reference paths for validation)
# --------------------------------------------------------------------------- #
def linear(x, w, b, *, relu=False, residual=None, use_pallas=True, tile_cap=1024):
    n, cin = x.shape
    cout = w.shape[1]
    b2 = b.reshape(1, cout).astype(jnp.float32)
    if not use_pallas:
        y = jnp.dot(x, w, precision=HIGHEST) + b2
        if relu:
            y = jnp.maximum(y, 0.0)
        if residual is not None:
            y = y + residual
        return y

    tn = _choose_tile(n, tile_cap)
    n_pad = pl.cdiv(n, tn) * tn
    xp = _pad_dim(x, 0, n_pad)
    args = [xp, w, b2]
    in_specs = [pl.BlockSpec((tn, cin), lambda i: (i, 0)),
                pl.BlockSpec((cin, cout), lambda i: (0, 0)),
                pl.BlockSpec((1, cout), lambda i: (0, 0))]
    if residual is not None:
        in_specs.append(pl.BlockSpec((tn, cout), lambda i: (i, 0)))
        args.append(_pad_dim(residual, 0, n_pad))
    kern = functools.partial(_linear_kernel, relu=relu,
                             has_res=residual is not None)
    bytes_needed = 4 * (tn * cin + cin * cout + cout + 2 * tn * cout
                        + (tn * cout if residual is not None else 0))
    out = pl.pallas_call(
        kern,
        out_shape=jax.ShapeDtypeStruct((n_pad, cout), x.dtype),
        grid=(n_pad // tn,),
        in_specs=in_specs,
        out_specs=pl.BlockSpec((tn, cout), lambda i: (i, 0)),
        compiler_params=_mosaic_params(("parallel",), bytes_needed),
    )(*args)
    return out[:n] if n_pad != n else out


def pairwise_dist(xn, *, use_pallas=True, tile_cap=512):
    """xn: (B, Np, C) L2-normalized features -> (B, Np, Np) neg. sq. distances."""
    B, Np, C = xn.shape
    if not use_pallas:
        sq = jnp.sum(xn * xn, axis=-1, keepdims=True)
        inner = jnp.einsum('bnc,bmc->bnm', xn, xn, precision=HIGHEST)
        return 2.0 * inner - sq - jnp.swapaxes(sq, 1, 2)

    t = _choose_tile(Np, tile_cap)
    np_pad = pl.cdiv(Np, t) * t
    xp = _pad_dim(xn, 1, np_pad)
    nt = np_pad // t
    bytes_needed = 4 * (2 * t * C + 2 * t * t)
    out = pl.pallas_call(
        _dist_kernel,
        out_shape=jax.ShapeDtypeStruct((B, np_pad, np_pad), xn.dtype),
        grid=(B, nt, nt),
        in_specs=[pl.BlockSpec((1, t, C), lambda b, i, j: (b, i, 0)),
                  pl.BlockSpec((1, t, C), lambda b, i, j: (b, j, 0))],
        out_specs=pl.BlockSpec((1, t, t), lambda b, i, j: (b, i, j)),
        compiler_params=_mosaic_params(("parallel", "parallel", "parallel"),
                                       bytes_needed),
    )(xp, xp)
    return out[:, :Np, :Np] if np_pad != Np else out


def mrconv(x_nc, nn_idx, wx, wm, bg, *, use_pallas=True, tile_cap=256):
    """x_nc: (B, Np, C); nn_idx: (B, Np, K) int32 -> (B, Np, 2C) graph features."""
    B, Np, C = x_nc.shape
    K = nn_idx.shape[-1]
    C2 = wx.shape[1]
    bg2 = bg.reshape(1, C2).astype(jnp.float32)
    if not use_pallas:
        xj = jax.vmap(lambda xb, ib: xb[ib])(x_nc, nn_idx)       # (B, Np, K, C)
        m = jnp.max(xj, axis=2) - x_nc                           # max_k(x_j - x_i)
        y = (jnp.dot(x_nc, wx, precision=HIGHEST)
             + jnp.dot(m, wm, precision=HIGHEST) + bg2)
        return jnp.maximum(y, 0.0)

    t = _choose_tile(Np, tile_cap)
    np_pad = pl.cdiv(Np, t) * t
    xp = _pad_dim(x_nc, 1, np_pad)
    ip = _pad_dim(nn_idx, 1, np_pad)
    nt = np_pad // t
    kern = functools.partial(_mrconv_kernel, k=K, tn=t)
    bytes_needed = 4 * (2 * np_pad * C + 3 * t * np_pad + t * K
                        + 2 * C * C2 + C2 + 2 * t * C2)
    out = pl.pallas_call(
        kern,
        out_shape=jax.ShapeDtypeStruct((B, np_pad, C2), x_nc.dtype),
        grid=(B, nt),
        in_specs=[pl.BlockSpec((1, np_pad, C), lambda b, i: (b, 0, 0)),
                  pl.BlockSpec((1, t, K), lambda b, i: (b, i, 0)),
                  pl.BlockSpec((C, C2), lambda b, i: (0, 0)),
                  pl.BlockSpec((C, C2), lambda b, i: (0, 0)),
                  pl.BlockSpec((1, C2), lambda b, i: (0, 0))],
        out_specs=pl.BlockSpec((1, t, C2), lambda b, i: (b, i, 0)),
        compiler_params=_mosaic_params(("parallel", "parallel"), bytes_needed),
    )(xp, ip, wx, wm, bg2)
    return out[:, :Np] if np_pad != Np else out


# --------------------------------------------------------------------------- #
# Plain-JAX glue: pooling / unpooling / pool-size logic / params
# --------------------------------------------------------------------------- #
def compute_pool_size(img_shape, img_min_shape):
    n = 1
    for h in img_shape:
        n *= h
    n_small = 1
    for h in img_min_shape:
        n_small *= h * 4
    if n > n_small:
        return [2 if h % 2 == 0 else 1 for h in img_shape]
    return [1 for _ in img_shape]


def max_pool3d_with_indices(x, pool):
    """MaxPool3d(pool, stride=pool, return_indices=True); indices flat over S*H*W."""
    B, C, S, H, W = x.shape
    ps, ph, pw = pool
    Sp, Hp, Wp = S // ps, H // ph, W // pw
    xr = x.reshape(B, C, Sp, ps, Hp, ph, Wp, pw)
    xr = jnp.transpose(xr, (0, 1, 2, 4, 6, 3, 5, 7)).reshape(
        B, C, Sp, Hp, Wp, ps * ph * pw)
    vals = jnp.max(xr, axis=-1)
    amax = jnp.argmax(xr, axis=-1)
    ds = amax // (ph * pw)
    rem = amax % (ph * pw)
    dh = rem // pw
    dw = rem % pw
    sp = jnp.arange(Sp).reshape(1, 1, Sp, 1, 1)
    hp = jnp.arange(Hp).reshape(1, 1, 1, Hp, 1)
    wp = jnp.arange(Wp).reshape(1, 1, 1, 1, Wp)
    flat = ((sp * ps + ds) * H + (hp * ph + dh)) * W + (wp * pw + dw)
    return vals, flat.astype(jnp.int32)


def max_unpool3d(x, indices, out_spatial):
    """MaxUnpool3d: scatter pooled values into a zero (B, C, S, H, W) tensor."""
    B, C2 = x.shape[:2]
    shw = out_spatial[0] * out_spatial[1] * out_spatial[2]
    xf = x.reshape(B, C2, -1)
    idxf = indices.reshape(B, C2, -1)
    bb = jnp.arange(B).reshape(B, 1, 1)
    cc = jnp.arange(C2).reshape(1, C2, 1)
    out = jnp.zeros((B, C2, shw), x.dtype).at[bb, cc, idxf].set(xf)
    return out.reshape(B, C2, *out_spatial)


def init_params(key, c):
    ks = jax.random.split(key, 14)
    rnd = lambda k, shape, s=0.2: s * jax.random.normal(k, shape, jnp.float32)
    return dict(
        w1=rnd(ks[0], (c, c)), b1=rnd(ks[1], (c,), 0.1),
        bn1_gamma=1.0 + rnd(ks[2], (c,), 0.1), bn1_beta=rnd(ks[3], (c,), 0.1),
        bn1_mean=rnd(ks[4], (c,), 0.1), bn1_var=1.0 + jnp.abs(rnd(ks[5], (c,), 0.1)),
        wg=rnd(ks[6], (2 * c, 2 * c)), bg=rnd(ks[7], (2 * c,), 0.1),
        w2=rnd(ks[8], (c, 2 * c)), b2=rnd(ks[9], (c,), 0.1),
        bn2_gamma=1.0 + rnd(ks[10], (c,), 0.1), bn2_beta=rnd(ks[11], (c,), 0.1),
        bn2_mean=rnd(ks[12], (c,), 0.1), bn2_var=1.0 + jnp.abs(rnd(ks[13], (c,), 0.1)),
    )


# --------------------------------------------------------------------------- #
# Full PoolGrapher forward
# --------------------------------------------------------------------------- #
def pool_grapher_forward(params, x, img_shape, img_min_shape, k=9,
                         use_pallas=True, nn_idx=None, pool_idx=None):
    eps_bn = 1e-5
    B, C, S, H, W = x.shape
    assert (S, H, W) == tuple(img_shape), 'input feature has wrong size'
    pool = compute_pool_size(img_shape, img_min_shape)

    # Fold inference-mode BatchNorm3d into the 1x1 convs (channels-last weights).
    a1 = params['bn1_gamma'] / jnp.sqrt(params['bn1_var'] + eps_bn)
    w1eff = (params['w1'] * a1[:, None]).T
    b1eff = params['b1'] * a1 + params['bn1_beta'] - a1 * params['bn1_mean']
    a2 = params['bn2_gamma'] / jnp.sqrt(params['bn2_var'] + eps_bn)
    w2eff = (params['w2'] * a2[:, None]).T
    b2eff = params['b2'] * a2 + params['bn2_beta'] - a2 * params['bn2_mean']
    # MRConv's conv sees interleaved channels [x_0, max_0, x_1, max_1, ...]; split
    # the weight so the kernel never interleaves channels in VMEM.
    wgT = params['wg'].T                       # (2C_in, 2C_out)
    wx, wm = wgT[0::2], wgT[1::2]              # each (C, 2C)

    # fc1: 1x1 Conv3d + BatchNorm3d
    x_cl = jnp.transpose(x, (0, 2, 3, 4, 1)).reshape(-1, C)
    y1 = linear(x_cl, w1eff, b1eff, use_pallas=use_pallas)
    y1_ncdhw = jnp.transpose(y1.reshape(B, S, H, W, C), (0, 4, 1, 2, 3))

    # MaxPool3d(pool_size, stride=pool_size, return_indices=True)
    vals, idx = max_pool3d_with_indices(y1_ncdhw, pool)
    Sp, Hp, Wp = vals.shape[2:]
    Np = Sp * Hp * Wp
    if pool_idx is not None:
        # Test hook: reuse the Pallas run's argmax positions so precision-induced
        # tie-breaking cannot diverge between the Pallas and reference runs.
        idx = pool_idx.reshape(B, C, Sp, Hp, Wp)
        vals = jnp.take_along_axis(y1_ncdhw.reshape(B, C, -1),
                                   pool_idx.reshape(B, C, Np),
                                   axis=2).reshape(B, C, Sp, Hp, Wp)
    xp = vals.reshape(B, C, Np)
    idxf = idx.reshape(B, C, Np)

    # DenseDilatedKnnGraph (dilation=1, stochastic=False): L2-normalize over C,
    # negative squared pairwise distances, top-k neighbors.
    nrm = jnp.sqrt(jnp.sum(xp * xp, axis=1, keepdims=True))
    xn_nc = jnp.transpose(xp / jnp.maximum(nrm, 1e-12), (0, 2, 1))   # (B, Np, C)
    dist = pairwise_dist(xn_nc, use_pallas=use_pallas)
    if nn_idx is None:
        # TODO(synk): for very large Np a fused in-kernel running top-k would avoid
        #             writing the full (B, Np, Np) matrix to HBM.
        _, nn_idx = lax.top_k(dist, k)                               # (B, Np, k)

    # MRConv: neighbors gathered *inside* the Pallas kernel (one-hot MXU gather),
    # max-relative aggregation + 1x1 conv + ReLU.
    x_nc = jnp.transpose(xp, (0, 2, 1))                              # (B, Np, C)
    yg = mrconv(x_nc, nn_idx, wx, wm, params['bg'], use_pallas=use_pallas)

    # MaxUnpool3d with channel-duplicated indices (torch.cat((indices, indices), 1)).
    yg_cn = jnp.transpose(yg, (0, 2, 1))                             # (B, 2C, Np)
    idx_cat = jnp.concatenate([idxf, idxf], axis=1)                  # (B, 2C, Np)
    unpooled = max_unpool3d(yg_cn.reshape(B, 2 * C, Sp, Hp, Wp),
                            idx_cat.reshape(B, 2 * C, Sp, Hp, Wp), (S, H, W))

    # fc2: 1x1 Conv3d + BatchNorm3d, then DropPath(0)=identity and residual add.
    # TODO(synk): fc2 on pooled rows only is not exactly equivalent because MaxPool3d
    #             indices are per-channel; the dense (tiled) fc2 is kept for exactness.
    u_cl = jnp.transpose(unpooled, (0, 2, 3, 4, 1)).reshape(-1, 2 * C)
    out_cl = linear(u_cl, w2eff, b2eff, residual=x_cl, use_pallas=use_pallas)
    out = jnp.transpose(out_cl.reshape(B, S, H, W, C), (0, 4, 1, 2, 3))
    return out, dist, nn_idx, idxf


# --------------------------------------------------------------------------- #
if __name__ == "__main__":
    B, C = 2, 4
    img_shape = (8, 8, 8)          # -> pool_size (2, 2, 2), 64 graph nodes
    img_min_shape = (1, 1, 1)
    K = 9                          # kernel_size=9, dilation=1

    key = jax.random.PRNGKey(0)
    kx, kp = jax.random.split(key)
    x = jax.random.normal(kx, (B, C) + img_shape, jnp.float32)
    params = init_params(kp, C)

    out_p, dist_p, nn_idx, pool_idx = pool_grapher_forward(
        params, x, img_shape, img_min_shape, K, use_pallas=True)
    out_p = jax.block_until_ready(out_p)

    # Pure-JAX f32 (HIGHEST) reference; share the kNN graph and pooling argmax so
    # bf16-pass MXU rounding in the Pallas path cannot flip discrete decisions.
    out_r, dist_r, _, _ = pool_grapher_forward(
        params, x, img_shape, img_min_shape, K, use_pallas=False,
        nn_idx=nn_idx, pool_idx=pool_idx)

    assert out_p.shape == x.shape
    assert bool(jnp.all(jnp.isfinite(out_p)))
    # Pallas path runs at default (bf16-pass) MXU precision vs. an f32 reference.
    assert bool(jnp.allclose(dist_p, dist_r, atol=2e-2, rtol=2e-2))
    assert bool(jnp.allclose(out_p, out_r, atol=2e-2, rtol=2e-2))
    print("KERNEL_OK")
</pallas_src>

<mosaic_0001>
module attributes {stable_mosaic.version = 11 : i64} {
  func.func @_linear_kernel(%arg0: i32, %arg1: memref<1024x4xf32, #tpu.memory_space<vmem>>, %arg2: memref<4x4xf32, #tpu.memory_space<vmem>>, %arg3: memref<1x4xf32, #tpu.memory_space<vmem>>, %arg4: memref<1024x4xf32, #tpu.memory_space<vmem>>) attributes {dimension_semantics = [#tpu.dimension_semantics<parallel>], iteration_bounds = array<i64: 1>, scalar_prefetch = 0 : i64, scratch_operands = 0 : i64, tpu.core_type = #tpu.core_type<tc>, window_params = [{transform_indices = @transform_0, window_bounds = array<i64: 1024, 4>}, {pipeline_mode = #tpu.pipeline_mode<synchronous>, transform_indices = @transform_1, window_bounds = array<i64: 4, 4>}, {pipeline_mode = #tpu.pipeline_mode<synchronous>, transform_indices = @transform_2, window_bounds = array<i64: 1, 4>}, {transform_indices = @transform_3, window_bounds = array<i64: 1024, 4>}]} {
    %c0 = arith.constant 0 : index
    %c0_0 = arith.constant 0 : index
    %0 = vector.load %arg1[%c0, %c0_0] : memref<1024x4xf32, #tpu.memory_space<vmem>>, vector<1024x4xf32>
    %c0_1 = arith.constant 0 : index
    %c0_2 = arith.constant 0 : index
    %1 = vector.load %arg2[%c0_1, %c0_2] : memref<4x4xf32, #tpu.memory_space<vmem>>, vector<4x4xf32>
    %cst = arith.constant dense<0.000000e+00> : vector<1024x4xf32>
    %2 = tpu.matmul %0, %1, %cst {dimension_numbers = #tpu.dot_dimension_numbers<[1], [0], [0], [1], [0, 0, 1, 1], [], []>} : vector<1024x4xf32>, vector<4x4xf32>, vector<1024x4xf32> -> vector<1024x4xf32>
    %c0_3 = arith.constant 0 : index
    %c0_4 = arith.constant 0 : index
    %3 = vector.load %arg3[%c0_3, %c0_4] : memref<1x4xf32, #tpu.memory_space<vmem>>, vector<1x4xf32>
    %4 = vector.broadcast %3 : vector<1x4xf32> to vector<1024x4xf32>
    %5 = arith.addf %2, %4 : vector<1024x4xf32>
    %c0_5 = arith.constant 0 : index
    %c0_6 = arith.constant 0 : index
    %6 = vector.load %arg4[%c0_5, %c0_6] : memref<1024x4xf32, #tpu.memory_space<vmem>>, vector<1024x4xf32>
    tpu.vector_store %arg4[%c0_5, %c0_6], %5 {strides = array<i32>} : memref<1024x4xf32, #tpu.memory_space<vmem>>, vector<1024x4xf32>,
    return
  }
  func.func @transform_0(%arg0: i32) -> (i32, i32) {
    %c0_i32 = arith.constant 0 : i32
    %c0_i32_0 = arith.constant 0 : i32
    return %arg0, %c0_i32 : i32, i32
  }
  func.func @transform_1(%arg0: i32) -> (i32, i32) {
    %c0_i32 = arith.constant 0 : i32
    %c0_i32_0 = arith.constant 0 : i32
    %c0_i32_1 = arith.constant 0 : i32
    return %c0_i32, %c0_i32_0 : i32, i32
  }
  func.func @transform_2(%arg0: i32) -> (i32, i32) {
    %c0_i32 = arith.constant 0 : i32
    %c0_i32_0 = arith.constant 0 : i32
    %c0_i32_1 = arith.constant 0 : i32
    return %c0_i32, %c0_i32_0 : i32, i32
  }
  func.func @transform_3(%arg0: i32) -> (i32, i32) {
    %c0_i32 = arith.constant 0 : i32
    %c0_i32_0 = arith.constant 0 : i32
    return %arg0, %c0_i32 : i32, i32
  }
}

</mosaic_0001>

<llo_original>
// kernel: tpu_custom_call.1
$region0: #{tpu_custom_call.1}
  #allocation0 [shape = 'u32[]', space=smem, size = 0x4, offset = 0x4, fixed_abs, tag = 'smem constant byte address 0x4 - core index']
  #allocation1 [shape = 'u32[144,128]{1,0:T(1,128)}', space=vmem, size = 0x12000, scoped, tag = 'internal scratch']
  %s0 = inlined_call_operand.vmem [shape: f32[1024,4], index: 0, kind: input, shape index: {}]
  %s1 = inlined_call_operand.vmem [shape: f32[4,4], index: 1, kind: input, shape index: {}]
  %s2 = inlined_call_operand.vmem [shape: f32[1,4], index: 2, kind: input, shape index: {}]
  %s3 = inlined_call_operand.vmem [shape: f32[1024,4], index: 3, kind: output, shape index: {}]
  %s4 = sld [smem:[#allocation0]]
  $region22: #{tpu_custom_call.1} parent=0
    _
  %s6 = ssub.s32 1, %s4
  %s7 = scalar_select 0, %s6, %s4
  // Predicated region
  $region2: #{tpu_custom_call.1} parent=0 // pred_check
    _
  $region3: #{tpu_custom_call.1} parent=0 // pred_check_branch
    %9 = sbr.rel (0) target = $region5
  $region4: #{tpu_custom_call.1} parent=0 // pred_region
    _
  $region5: #{tpu_custom_call.1} parent=0 // pred_fallthru
    _
  // Predicated region
  $region6: #{tpu_custom_call.1} parent=0 // pred_check
    _
  $region7: #{tpu_custom_call.1} parent=0 // pred_check_branch
    %11 = sbr.rel (0) target = $region9
  $region8: #{tpu_custom_call.1} parent=0 // pred_region
    _
  $region9: #{tpu_custom_call.1} parent=0 // pred_fallthru
    _
  // Predicated region
  $region10: #{tpu_custom_call.1} parent=0 // pred_check
    _
  $region11: #{tpu_custom_call.1} parent=0 // pred_check_branch
    %13 = sbr.rel (0) target = $region13
  $region12: #{tpu_custom_call.1} parent=0 // pred_region
    _
  $region13: #{tpu_custom_call.1} parent=0 // pred_fallthru
    _
  %v14 = vld [vmem:[%s0] sm:$0xff]
  %v15 = vld [vmem:[%s0 + $0x8] sm:$0xff]
  %v16 = vld [vmem:[%s0 + $0x10] sm:$0xff]
  %v17 = vld [vmem:[%s0 + $0x18] sm:$0xff]
  %v18 = vld [vmem:[%s0 + $0x20] sm:$0xff]
  %v19 = vld [vmem:[%s0 + $0x28] sm:$0xff]
  %v20 = vld [vmem:[%s0 + $0x30] sm:$0xff]
  %v21 = vld [vmem:[%s0 + $0x38] sm:$0xff]
  %v22 = vld [vmem:[%s0 + $0x40] sm:$0xff]
  %v23 = vld [vmem:[%s0 + $0x48] sm:$0xff]
  %v24 = vld [vmem:[%s0 + $0x50] sm:$0xff]
  %v25 = vld [vmem:[%s0 + $0x58] sm:$0xff]
  %v26 = vld [vmem:[%s0 + $0x60] sm:$0xff]
  %v27 = vld [vmem:[%s0 + $0x68] sm:$0xff]
  %v28 = vld [vmem:[%s0 + $0x70] sm:$0xff]
  %v29 = vld [vmem:[%s0 + $0x78] sm:$0xff]
  %v30 = vld [vmem:[%s0 + $0x80] sm:$0xff]
  %v31 = vld [vmem:[%s0 + $0x88] sm:$0xff]
  %v32 = vld [vmem:[%s0 + $0x90] sm:$0xff]
  %v33 = vld [vmem:[%s0 + $0x98] sm:$0xff]
  %v34 = vld [vmem:[%s0 + $0xa0] sm:$0xff]
  %v35 = vld [vmem:[%s0 + $0xa8] sm:$0xff]
  %v36 = vld [vmem:[%s0 + $0xb0] sm:$0xff]
  %v37 = vld [vmem:[%s0 + $0xb8] sm:$0xff]
  %v38 = vld [vmem:[%s0 + $0xc0] sm:$0xff]
  %v39 = vld [vmem:[%s0 + $0xc8] sm:$0xff]
  %v40 = vld [vmem:[%s0 + $0xd0] sm:$0xff]
  %v41 = vld [vmem:[%s0 + $0xd8] sm:$0xff]
  %v42 = vld [vmem:[%s0 + $0xe0] sm:$0xff]
  %v43 = vld [vmem:[%s0 + $0xe8] sm:$0xff]
  %v44 = vld [vmem:[%s0 + $0xf0] sm:$0xff]
  %v45 = vld [vmem:[%s0 + $0xf8] sm:$0xff]
  %v46 = vld [vmem:[%s0 + $0x100] sm:$0xff]
  %v47 = vld [vmem:[%s0 + $0x108] sm:$0xff]
  %v48 = vld [vmem:[%s0 + $0x110] sm:$0xff]
  %v49 = vld [vmem:[%s0 + $0x118] sm:$0xff]
  %v50 = vld [vmem:[%s0 + $0x120] sm:$0xff]
  %v51 = vld [vmem:[%s0 + $0x128] sm:$0xff]
  %v52 = vld [vmem:[%s0 + $0x130] sm:$0xff]
  %v53 = vld [vmem:[%s0 + $0x138] sm:$0xff]
  %v54 = vld [vmem:[%s0 + $0x140] sm:$0xff]
  %v55 = vld [vmem:[%s0 + $0x148] sm:$0xff]
  %v56 = vld [vmem:[%s0 + $0x150] sm:$0xff]
  %v57 = vld [vmem:[%s0 + $0x158] sm:$0xff]
  %v58 = vld [vmem:[%s0 + $0x160] sm:$0xff]
  %v59 = vld [vmem:[%s0 + $0x168] sm:$0xff]
  %v60 = vld [vmem:[%s0 + $0x170] sm:$0xff]
  %v61 = vld [vmem:[%s0 + $0x178] sm:$0xff]
  %v62 = vld [vmem:[%s0 + $0x180] sm:$0xff]
  %v63 = vld [vmem:[%s0 + $0x188] sm:$0xff]
  %v64 = vld [vmem:[%s0 + $0x190] sm:$0xff]
  %v65 = vld [vmem:[%s0 + $0x198] sm:$0xff]
  %v66 = vld [vmem:[%s0 + $0x1a0] sm:$0xff]
  %v67 = vld [vmem:[%s0 + $0x1a8] sm:$0xff]
  %v68 = vld [vmem:[%s0 + $0x1b0] sm:$0xff]
  %v69 = vld [vmem:[%s0 + $0x1b8] sm:$0xff]
  %v70 = vld [vmem:[%s0 + $0x1c0] sm:$0xff]
  %v71 = vld [vmem:[%s0 + $0x1c8] sm:$0xff]
  %v72 = vld [vmem:[%s0 + $0x1d0] sm:$0xff]
  %v73 = vld [vmem:[%s0 + $0x1d8] sm:$0xff]
  %v74 = vld [vmem:[%s0 + $0x1e0] sm:$0xff]
  %v75 = vld [vmem:[%s0 + $0x1e8] sm:$0xff]
  %v76 = vld [vmem:[%s0 + $0x1f0] sm:$0xff]
  %v77 = vld [vmem:[%s0 + $0x1f8] sm:$0xff]
  %v78 = vld [vmem:[%s0 + $0x200] sm:$0xff]
  %v79 = vld [vmem:[%s0 + $0x208] sm:$0xff]
  %v80 = vld [vmem:[%s0 + $0x210] sm:$0xff]
  %v81 = vld [vmem:[%s0 + $0x218] sm:$0xff]
  %v82 = vld [vmem:[%s0 + $0x220] sm:$0xff]
  %v83 = vld [vmem:[%s0 + $0x228] sm:$0xff]
  %v84 = vld [vmem:[%s0 + $0x230] sm:$0xff]
  %v85 = vld [vmem:[%s0 + $0x238] sm:$0xff]
  %v86 = vld [vmem:[%s0 + $0x240] sm:$0xff]
  %v87 = vld [vmem:[%s0 + $0x248] sm:$0xff]
  %v88 = vld [vmem:[%s0 + $0x250] sm:$0xff]
  %v89 = vld [vmem:[%s0 + $0x258] sm:$0xff]
  %v90 = vld [vmem:[%s0 + $0x260] sm:$0xff]
  %v91 = vld [vmem:[%s0 + $0x268] sm:$0xff]
  %v92 = vld [vmem:[%s0 + $0x270] sm:$0xff]
  %v93 = vld [vmem:[%s0 + $0x278] sm:$0xff]
  %v94 = vld [vmem:[%s0 + $0x280] sm:$0xff]
  %v95 = vld [vmem:[%s0 + $0x288] sm:$0xff]
  %v96 = vld [vmem:[%s0 + $0x290] sm:$0xff]
  %v97 = vld [vmem:[%s0 + $0x298] sm:$0xff]
  %v98 = vld [vmem:[%s0 + $0x2a0] sm:$0xff]
  %v99 = vld [vmem:[%s0 + $0x2a8] sm:$0xff]
  %v100 = vld [vmem:[%s0 + $0x2b0] sm:$0xff]
  %v101 = vld [vmem:[%s0 + $0x2b8] sm:$0xff]
  %v102 = vld [vmem:[%s0 + $0x2c0] sm:$0xff]
  %v103 = vld [vmem:[%s0 + $0x2c8] sm:$0xff]
  %v104 = vld [vmem:[%s0 + $0x2d0] sm:$0xff]
  %v105 = vld [vmem:[%s0 + $0x2d8] sm:$0xff]
  %v106 = vld [vmem:[%s0 + $0x2e0] sm:$0xff]
  %v107 = vld [vmem:[%s0 + $0x2e8] sm:$0xff]
  %v108 = vld [vmem:[%s0 + $0x2f0] sm:$0xff]
  %v109 = vld [vmem:[%s0 + $0x2f8] sm:$0xff]
  %v110 = vld [vmem:[%s0 + $0x300] sm:$0xff]
  %v111 = vld [vmem:[%s0 + $0x308] sm:$0xff]
  %v112 = vld [vmem:[%s0 + $0x310] sm:$0xff]
  %v113 = vld [vmem:[%s0 + $0x318] sm:$0xff]
  %v114 = vld [vmem:[%s0 + $0x320] sm:$0xff]
  %v115 = vld [vmem:[%s0 + $0x328] sm:$0xff]
  %v116 = vld [vmem:[%s0 + $0x330] sm:$0xff]
  %v117 = vld [vmem:[%s0 + $0x338] sm:$0xff]
  %v118 = vld [vmem:[%s0 + $0x340] sm:$0xff]
  %v119 = vld [vmem:[%s0 + $0x348] sm:$0xff]
  %v120 = vld [vmem:[%s0 + $0x350] sm:$0xff]
  %v121 = vld [vmem:[%s0 + $0x358] sm:$0xff]
  %v122 = vld [vmem:[%s0 + $0x360] sm:$0xff]
  %v123 = vld [vmem:[%s0 + $0x368] sm:$0xff]
  %v124 = vld [vmem:[%s0 + $0x370] sm:$0xff]
  %v125 = vld [vmem:[%s0 + $0x378] sm:$0xff]
  %v126 = vld [vmem:[%s0 + $0x380] sm:$0xff]
  %v127 = vld [vmem:[%s0 + $0x388] sm:$0xff]
  %v128 = vld [vmem:[%s0 + $0x390] sm:$0xff]
  %v129 = vld [vmem:[%s0 + $0x398] sm:$0xff]
  %v130 = vld [vmem:[%s0 + $0x3a0] sm:$0xff]
  %v131 = vld [vmem:[%s0 + $0x3a8] sm:$0xff]
  %v132 = vld [vmem:[%s0 + $0x3b0] sm:$0xff]
  %v133 = vld [vmem:[%s0 + $0x3b8] sm:$0xff]
  %v134 = vld [vmem:[%s0 + $0x3c0] sm:$0xff]
  %v135 = vld [vmem:[%s0 + $0x3c8] sm:$0xff]
  %v136 = vld [vmem:[%s0 + $0x3d0] sm:$0xff]
  %v137 = vld [vmem:[%s0 + $0x3d8] sm:$0xff]
  %v138 = vld [vmem:[%s0 + $0x3e0] sm:$0xff]
  %v139 = vld [vmem:[%s0 + $0x3e8] sm:$0xff]
  %v140 = vld [vmem:[%s0 + $0x3f0] sm:$0xff]
  %v141 = vld [vmem:[%s0 + $0x3f8] sm:$0xff]
  %v142 = vld [vmem:[%s1] sm:$0xf]
  %v143 = vld [vmem:[%s2] sm:$0x1]
  %v145 = vlaneseq
  %v146 = vshrl.u32 %v145, 7
  %v147 = vsub.s32 0, %v146
  %v148 = vrot.slane %v143, %v147
  %vm150 = vcmask 31744
  %v152 = vsel %vm150, %v14, 0
  %v155 = vsel %vm150, %v15, 0
  %v158 = vsel %vm150, %v16, 0
  %v161 = vsel %vm150, %v17, 0
  %v164 = vsel %vm150, %v18, 0
  %v167 = vsel %vm150, %v19, 0
  %v170 = vsel %vm150, %v20, 0
  %v173 = vsel %vm150, %v21, 0
  %v176 = vsel %vm150, %v22, 0
  %v179 = vsel %vm150, %v23, 0
  %v182 = vsel %vm150, %v24, 0
  %v185 = vsel %vm150, %v25, 0
  %v188 = vsel %vm150, %v26, 0
  %v191 = vsel %vm150, %v27, 0
  %v194 = vsel %vm150, %v28, 0
  %v197 = vsel %vm150, %v29, 0
  %v200 = vsel %vm150, %v30, 0
  %v203 = vsel %vm150, %v31, 0
  %v206 = vsel %vm150, %v32, 0
  %v209 = vsel %vm150, %v33, 0
  %v212 = vsel %vm150, %v34, 0
  %v215 = vsel %vm150, %v35, 0
  %v218 = vsel %vm150, %v36, 0
  %v221 = vsel %vm150, %v37, 0
  %v224 = vsel %vm150, %v38, 0
  %v227 = vsel %vm150, %v39, 0
  %v230 = vsel %vm150, %v40, 0
  %v233 = vsel %vm150, %v41, 0
  %v236 = vsel %vm150, %v42, 0
  %v239 = vsel %vm150, %v43, 0
  %v242 = vsel %vm150, %v44, 0
  %v245 = vsel %vm150, %v45, 0
  %v248 = vsel %vm150, %v46, 0
  %v251 = vsel %vm150, %v47, 0
  %v254 = vsel %vm150, %v48, 0
  %v257 = vsel %vm150, %v49, 0
  %v260 = vsel %vm150, %v50, 0
  %v263 = vsel %vm150, %v51, 0
  %v266 = vsel %vm150, %v52, 0
  %v269 = vsel %vm150, %v53, 0
  %v272 = vsel %vm150, %v54, 0
  %v275 = vsel %vm150, %v55, 0
  %v278 = vsel %vm150, %v56, 0
  %v281 = vsel %vm150, %v57, 0
  %v284 = vsel %vm150, %v58, 0
  %v287 = vsel %vm150, %v59, 0
  %v290 = vsel %vm150, %v60, 0
  %v293 = vsel %vm150, %v61, 0
  %v296 = vsel %vm150, %v62, 0
  %v299 = vsel %vm150, %v63, 0
  %v302 = vsel %vm150, %v64, 0
  %v305 = vsel %vm150, %v65, 0
  %v308 = vsel %vm150, %v66, 0
  %v311 = vsel %vm150, %v67, 0
  %v314 = vsel %vm150, %v68, 0
  %v317 = vsel %vm150, %v69, 0
  %v320 = vsel %vm150, %v70, 0
  %v323 = vsel %vm150, %v71, 0
  %v326 = vsel %vm150, %v72, 0
  %v329 = vsel %vm150, %v73, 0
  %v332 = vsel %vm150, %v74, 0
  %v335 = vsel %vm150, %v75, 0
  %v338 = vsel %vm150, %v76, 0
  %v341 = vsel %vm150, %v77, 0
  %v344 = vsel %vm150, %v78, 0
  %v347 = vsel %vm150, %v79, 0
  %v350 = vsel %vm150, %v80, 0
  %v353 = vsel %vm150, %v81, 0
  %v356 = vsel %vm150, %v82, 0
  %v359 = vsel %vm150, %v83, 0
  %v362 = vsel %vm150, %v84, 0
  %v365 = vsel %vm150, %v85, 0
  %v368 = vsel %vm150, %v86, 0
  %v371 = vsel %vm150, %v87, 0
  %v374 = vsel %vm150, %v88, 0
  %v377 = vsel %vm150, %v89, 0
  %v380 = vsel %vm150, %v90, 0
  %v383 = vsel %vm150, %v91, 0
  %v386 = vsel %vm150, %v92, 0
  %v389 = vsel %vm150, %v93, 0
  %v392 = vsel %vm150, %v94, 0
  %v395 = vsel %vm150, %v95, 0
  %v398 = vsel %vm150, %v96, 0
  %v401 = vsel %vm150, %v97, 0
  %v404 = vsel %vm150, %v98, 0
  %v407 = vsel %vm150, %v99, 0
  %v410 = vsel %vm150, %v100, 0
  %v413 = vsel %vm150, %v101, 0
  %v416 = vsel %vm150, %v102, 0
  %v419 = vsel %vm150, %v103, 0
  %v422 = vsel %vm150, %v104, 0
  %v425 = vsel %vm150, %v105, 0
  %v428 = vsel %vm150, %v106, 0
  %v431 = vsel %vm150, %v107, 0
  %v434 = vsel %vm150, %v108, 0
  %v437 = vsel %vm150, %v109, 0
  %v440 = vsel %vm150, %v110, 0
  %v443 = vsel %vm150, %v111, 0
  %v446 = vsel %vm150, %v112, 0
  %v449 = vsel %vm150, %v113, 0
  %v452 = vsel %vm150, %v114, 0
  %v455 = vsel %vm150, %v115, 0
  %v458 = vsel %vm150, %v116, 0
  %v461 = vsel %vm150, %v117, 0
  %v464 = vsel %vm150, %v118, 0
  %v467 = vsel %vm150, %v119, 0
  %v470 = vsel %vm150, %v120, 0
  %v473 = vsel %vm150, %v121, 0
  %v476 = vsel %vm150, %v122, 0
  %v479 = vsel %vm150, %v123, 0
  %v482 = vsel %vm150, %v124, 0
  %v485 = vsel %vm150, %v125, 0
  %v488 = vsel %vm150, %v126, 0
  %v491 = vsel %vm150, %v127, 0
  %v494 = vsel %vm150, %v128, 0
  %v497 = vsel %vm150, %v129, 0
  %v500 = vsel %vm150, %v130, 0
  %v503 = vsel %vm150, %v131, 0
  %v506 = vsel %vm150, %v132, 0
  %v509 = vsel %vm150, %v133, 0
  %v512 = vsel %vm150, %v134, 0
  %v515 = vsel %vm150, %v135, 0
  %v518 = vsel %vm150, %v136, 0
  %v521 = vsel %vm150, %v137, 0
  %v524 = vsel %vm150, %v138, 0
  %v527 = vsel %vm150, %v139, 0
  %v530 = vsel %vm150, %v140, 0
  %v533 = vsel %vm150, %v141, 0
  %vm535 = vcmask 1043456
  %v537 = vsel %vm535, %v142, 0
  %539 = vmatprep.subr.mxu0 0.0
  %540 = vmatpush1.msra.mxu0 %v537
  %541 = vmatprep.subr.mxu0 0.0
  %542 = vmatpush1.msra.mxu0 0.0
  %543 = vmatprep.subr.mxu0 0.0
  %544 = vmatpush1.msra.mxu0 0.0
  %545 = vmatprep.subr.mxu0 0.0
  %546 = vmatpush1.msra.mxu0 0.0
  %547 = vmatprep.subr.mxu0 0.0
  %548 = vmatpush1.msra.mxu0 0.0
  %549 = vmatprep.subr.mxu0 0.0
  %550 = vmatpush1.msra.mxu0 0.0
  %551 = vmatprep.subr.mxu0 0.0
  %552 = vmatpush1.msra.mxu0 0.0
  %553 = vmatprep.subr.mxu0 0.0
  %554 = vmatpush1.msra.mxu0 0.0
  %555 = vmatprep.subr.mxu0 0.0
  %556 = vmatpush1.msra.mxu0 0.0
  %557 = vmatprep.subr.mxu0 0.0
  %558 = vmatpush1.msra.mxu0 0.0
  %559 = vmatprep.subr.mxu0 0.0
  %560 = vmatpush1.msra.mxu0 0.0
  %561 = vmatprep.subr.mxu0 0.0
  %562 = vmatpush1.msra.mxu0 0.0
  %563 = vmatprep.subr.mxu0 0.0
  %564 = vmatpush1.msra.mxu0 0.0
  %565 = vmatprep.subr.mxu0 0.0
  %566 = vmatpush1.msra.mxu0 0.0
  %567 = vmatprep.subr.mxu0 0.0
  %568 = vmatpush1.msra.mxu0 0.0
  %569 = vmatprep.subr.mxu0 0.0
  %570 = vmatpush1.msra.mxu0 0.0
  %571 = vmatprep.subr.mxu0 0.0
  %572 = vmatpush1.msra.mxu0 0.0
  %573 = vmatprep.subr.mxu0 0.0
  %574 = vmatpush1.msra.mxu0 0.0
  %575 = vmatprep.subr.mxu0 0.0
  %576 = vmatpush1.msra.mxu0 0.0
  %577 = vmatprep.subr.mxu0 0.0
  %578 = vmatpush1.msra.mxu0 0.0
  %579 = vmatprep.subr.mxu0 0.0
  %580 = vmatpush1.msra.mxu0 0.0
  %581 = vmatprep.subr.mxu0 0.0
  %582 = vmatpush1.msra.mxu0 0.0
  %583 = vmatprep.subr.mxu0 0.0
  %584 = vmatpush1.msra.mxu0 0.0
  %585 = vmatprep.subr.mxu0 0.0
  %586 = vmatpush1.msra.mxu0 0.0
  %587 = vmatprep.subr.mxu0 0.0
  %588 = vmatpush1.msra.mxu0 0.0
  %589 = vmatprep.subr.mxu0 0.0
  %590 = vmatpush1.msra.mxu0 0.0
  %591 = vmatprep.subr.mxu0 0.0
  %592 = vmatpush1.msra.mxu0 0.0
  %593 = vmatprep.subr.mxu0 0.0
  %594 = vmatpush1.msra.mxu0 0.0
  %595 = vmatprep.subr.mxu0 0.0
  %596 = vmatpush1.msra.mxu0 0.0
  %597 = vmatprep.subr.mxu0 0.0
  %598 = vmatpush1.msra.mxu0 0.0
  %599 = vmatprep.subr.mxu0 0.0
  %600 = vmatpush1.msra.mxu0 0.0
  %601 = vmatprep.subr.mxu0 0.0
  %602 = vmatpush1.msra.mxu0 0.0
  %603 = vmatprep.mubr.f32.mxu0 0.0
  %604 = vmatmul.mubr.f32.gmra.mrb[0].mxu0 %v152
  %v605 = vpop.f32.mrb[0].mxu0
  %v606 = vadd.f32 %v148, %v605
  %v607 = vpop.f32.mrb[0].mxu0
  %608 = vmatprep.mubr.f32.mxu0 0.0
  %609 = vmatmul.mubr.f32.gmra.mrb[0].mxu0 %v155
  %v610 = vpop.f32.mrb[0].mxu0
  %v611 = vadd.f32 %v148, %v610
  %v612 = vpop.f32.mrb[0].mxu0
  %613 = vmatprep.mubr.f32.mxu0 0.0
  %614 = vmatmul.mubr.f32.gmra.mrb[0].mxu0 %v158
  %v615 = vpop.f32.mrb[0].mxu0
  %v616 = vadd.f32 %v148, %v615
  %v617 = vpop.f32.mrb[0].mxu0
  %618 = vmatprep.mubr.f32.mxu0 0.0
  %619 = vmatmul.mubr.f32.gmra.mrb[0].mxu0 %v161
  %v620 = vpop.f32.mrb[0].mxu0
  %v621 = vadd.f32 %v148, %v620
  %v622 = vpop.f32.mrb[0].mxu0
  %623 = vmatprep.mubr.f32.mxu0 0.0
  %624 = vmatmul.mubr.f32.gmra.mrb[0].mxu0 %v164
  %v625 = vpop.f32.mrb[0].mxu0
  %v626 = vadd.f32 %v148, %v625
  %v627 = vpop.f32.mrb[0].mxu0
  %628 = vmatprep.mubr.f32.mxu0 0.0
  %629 = vmatmul.mubr.f32.gmra.mrb[0].mxu0 %v167
  %v630 = vpop.f32.mrb[0].mxu0
  %v631 = vadd.f32 %v148, %v630
  %v632 = vpop.f32.mrb[0].mxu0
  %633 = vmatprep.mubr.f32.mxu0 0.0
  %634 = vmatmul.mubr.f32.gmra.mrb[0].mxu0 %v170
  %v635 = vpop.f32.mrb[0].mxu0
  %v636 = vadd.f32 %v148, %v635
  %v637 = vpop.f32.mrb[0].mxu0
  %638 = vmatprep.mubr.f32.mxu0 0.0
  %639 = vmatmul.mubr.f32.gmra.mrb[0].mxu0 %v173
  %v640 = vpop.f32.mrb[0].mxu0
  %v641 = vadd.f32 %v148, %v640
  %v642 = vpop.f32.mrb[0].mxu0
  %643 = vmatprep.mubr.f32.mxu0 0.0
  %644 = vmatmul.mubr.f32.gmra.mrb[0].mxu0 %v176
  %v645 = vpop.f32.mrb[0].mxu0
  %v646 = vadd.f32 %v148, %v645
  %v647 = vpop.f32.mrb[0].mxu0
  %648 = vmatprep.mubr.f32.mxu0 0.0
  %649 = vmatmul.mubr.f32.gmra.mrb[0].mxu0 %v179
  %v650 = vpop.f32.mrb[0].mxu0
  %v651 = vadd.f32 %v148, %v650
  %v652 = vpop.f32.mrb[0].mxu0
  %653 = vmatprep.mubr.f32.mxu0 0.0
  %654 = vmatmul.mubr.f32.gmra.mrb[0].mxu0 %v182
  %v655 = vpop.f32.mrb[0].mxu0
  %v656 = vadd.f32 %v148, %v655
  %v657 = vpop.f32.mrb[0].mxu0
  %658 = vmatprep.mubr.f32.mxu0 0.0
  %659 = vmatmul.mubr.f32.gmra.mrb[0].mxu0 %v185
  %v660 = vpop.f32.mrb[0].mxu0
  %v661 = vadd.f32 %v148, %v660
  %v662 = vpop.f32.mrb[0].mxu0
  %663 = vmatprep.mubr.f32.mxu0 0.0
  %664 = vmatmul.mubr.f32.gmra.mrb[0].mxu0 %v188
  %v665 = vpop.f32.mrb[0].mxu0
  %v666 = vadd.f32 %v148, %v665
  %v667 = vpop.f32.mrb[0].mxu0
  %668 = vmatprep.mubr.f32.mxu0 0.0
  %669 = vmatmul.mubr.f32.gmra.mrb[0].mxu0 %v191
  %v670 = vpop.f32.mrb[0].mxu0
  %v671 = vadd.f32 %v148, %v670
  %v672 = vpop.f32.mrb[0].mxu0
  %673 = vmatprep.mubr.f32.mxu0 0.0
  %674 = vmatmul.mubr.f32.gmra.mrb[0].mxu0 %v194
  %v675 = vpop.f32.mrb[0].mxu0
  %v676 = vadd.f32 %v148, %v675
  %v677 = vpop.f32.mrb[0].mxu0
  %678 = vmatprep.mubr.f32.mxu0 0.0
  %679 = vmatmul.mubr.f32.gmra.mrb[0].mxu0 %v197
  %v680 = vpop.f32.mrb[0].mxu0
  %v681 = vadd.f32 %v148, %v680
  %v682 = vpop.f32.mrb[0].mxu0
  %683 = vmatprep.mubr.f32.mxu0 0.0
  %684 = vmatmul.mubr.f32.gmra.mrb[0].mxu0 %v200
  %v685 = vpop.f32.mrb[0].mxu0
  %v686 = vadd.f32 %v148, %v685
  %v687 = vpop.f32.mrb[0].mxu0
  %688 = vmatprep.mubr.f32.mxu0 0.0
  %689 = vmatmul.mubr.f32.gmra.mrb[0].mxu0 %v203
  %v690 = vpop.f32.mrb[0].mxu0
  %v691 = vadd.f32 %v148, %v690
  %v692 = vpop.f32.mrb[0].mxu0
  %693 = vmatprep.mubr.f32.mxu0 0.0
  %694 = vmatmul.mubr.f32.gmra.mrb[0].mxu0 %v206
  %v695 = vpop.f32.mrb[0].mxu0
  %v696 = vadd.f32 %v148, %v695
  %v697 = vpop.f32.mrb[0].mxu0
  %698 = vmatprep.mubr.f32.mxu0 0.0
  %699 = vmatmul.mubr.f32.gmra.mrb[0].mxu0 %v209
  %v700 = vpop.f32.mrb[0].mxu0
  %v701 = vadd.f32 %v148, %v700
  %v702 = vpop.f32.mrb[0].mxu0
  %703 = vmatprep.mubr.f32.mxu0 0.0
  %704 = vmatmul.mubr.f32.gmra.mrb[0].mxu0 %v212
  %v705 = vpop.f32.mrb[0].mxu0
  %v706 = vadd.f32 %v148, %v705
  %v707 = vpop.f32.mrb[0].mxu0
  %708 = vmatprep.mubr.f32.mxu0 0.0
  %709 = vmatmul.mubr.f32.gmra.mrb[0].mxu0 %v215
  %v710 = vpop.f32.mrb[0].mxu0
  %v711 = vadd.f32 %v148, %v710
  %v712 = vpop.f32.mrb[0].mxu0
  %713 = vmatprep.mubr.f32.mxu0 0.0
  %714 = vmatmul.mubr.f32.gmra.mrb[0].mxu0 %v218
  %v715 = vpop.f32.mrb[0].mxu0
  %v716 = vadd.f32 %v148, %v715
  %v717 = vpop.f32.mrb[0].mxu0
  %718 = vmatprep.mubr.f32.mxu0 0.0
  %719 = vmatmul.mubr.f32.gmra.mrb[0].mxu0 %v221
  %v720 = vpop.f32.mrb[0].mxu0
  %v721 = vadd.f32 %v148, %v720
  %v722 = vpop.f32.mrb[0].mxu0
  %723 = vmatprep.mubr.f32.mxu0 0.0
  %724 = vmatmul.mubr.f32.gmra.mrb[0].mxu0 %v224
  %v725 = vpop.f32.mrb[0].mxu0
  %v726 = vadd.f32 %v148, %v725
  %v727 = vpop.f32.mrb[0].mxu0
  %728 = vmatprep.mubr.f32.mxu0 0.0
  %729 = vmatmul.mubr.f32.gmra.mrb[0].mxu0 %v227
  %v730 = vpop.f32.mrb[0].mxu0
  %v731 = vadd.f32 %v148, %v730
  %v732 = vpop.f32.mrb[0].mxu0
  %733 = vmatprep.mubr.f32.mxu0 0.0
  %734 = vmatmul.mubr.f32.gmra.mrb[0].mxu0 %v230
  %v735 = vpop.f32.mrb[0].mxu0
  %v736 = vadd.f32 %v148, %v735
  %v737 = vpop.f32.mrb[0].mxu0
  %738 = vmatprep.mubr.f32.mxu0 0.0
  %739 = vmatmul.mubr.f32.gmra.mrb[0].mxu0 %v233
  %v740 = vpop.f32.mrb[0].mxu0
  %v741 = vadd.f32 %v148, %v740
  %v742 = vpop.f32.mrb[0].mxu0
  %743 = vmatprep.mubr.f32.mxu0 0.0
  %744 = vmatmul.mubr.f32.gmra.mrb[0].mxu0 %v236
  %v745 = vpop.f32.mrb[0].mxu0
  %v746 = vadd.f32 %v148, %v745
  %v747 = vpop.f32.mrb[0].mxu0
  %748 = vmatprep.mubr.f32.mxu0 0.0
  %749 = vmatmul.mubr.f32.gmra.mrb[0].mxu0 %v239
  %v750 = vpop.f32.mrb[0].mxu0
  %v751 = vadd.f32 %v148, %v750
  %v752 = vpop.f32.mrb[0].mxu0
  %753 = vmatprep.mubr.f32.mxu0 0.0
  %754 = vmatmul.mubr.f32.gmra.mrb[0].mxu0 %v242
  %v755 = vpop.f32.mrb[0].mxu0
  %v756 = vadd.f32 %v148, %v755
  %v757 = vpop.f32.mrb[0].mxu0
  %758 = vmatprep.mubr.f32.mxu0 0.0
  %759 = vmatmul.mubr.f32.gmra.mrb[0].mxu0 %v245
  %v760 = vpop.f32.mrb[0].mxu0
  %v761 = vadd.f32 %v148, %v760
  %v762 = vpop.f32.mrb[0].mxu0
  %763 = vmatprep.mubr.f32.mxu0 0.0
  %764 = vmatmul.mubr.f32.gmra.mrb[0].mxu0 %v248
  %v765 = vpop.f32.mrb[0].mxu0
  %v766 = vadd.f32 %v148, %v765
  %v767 = vpop.f32.mrb[0].mxu0
  %768 = vmatprep.mubr.f32.mxu0 0.0
  %769 = vmatmul.mubr.f32.gmra.mrb[0].mxu0 %v251
  %v770 = vpop.f32.mrb[0].mxu0
  %v771 = vadd.f32 %v148, %v770
  %v772 = vpop.f32.mrb[0].mxu0
  %773 = vmatprep.mubr.f32.mxu0 0.0
  %774 = vmatmul.mubr.f32.gmra.mrb[0].mxu0 %v254
  %v775 = vpop.f32.mrb[0].mxu0
  %v776 = vadd.f32 %v148, %v775
  %v777 = vpop.f32.mrb[0].mxu0
  %778 = vmatprep.mubr.f32.mxu0 0.0
  %779 = vmatmul.mubr.f32.gmra.mrb[0].mxu0 %v257
  %v780 = vpop.f32.mrb[0].mxu0
  %v781 = vadd.f32 %v148, %v780
  %v782 = vpop.f32.mrb[0].mxu0
  %783 = vmatprep.mubr.f32.mxu0 0.0
  %784 = vmatmul.mubr.f32.gmra.mrb[0].mxu0 %v260
  %v785 = vpop.f32.mrb[0].mxu0
  %v786 = vadd.f32 %v148, %v785
  %v787 = vpop.f32.mrb[0].mxu0
  %788 = vmatprep.mubr.f32.mxu0 0.0
  %789 = vmatmul.mubr.f32.gmra.mrb[0].mxu0 %v263
  %v790 = vpop.f32.mrb[0].mxu0
  %v791 = vadd.f32 %v148, %v790
  %v792 = vpop.f32.mrb[0].mxu0
  %793 = vmatprep.mubr.f32.mxu0 0.0
  %794 = vmatmul.mubr.f32.gmra.mrb[0].mxu0 %v266
  %v795 = vpop.f32.mrb[0].mxu0
  %v796 = vadd.f32 %v148, %v795
  %v797 = vpop.f32.mrb[0].mxu0
  %798 = vmatprep.mubr.f32.mxu0 0.0
  %799 = vmatmul.mubr.f32.gmra.mrb[0].mxu0 %v269
  %v800 = vpop.f32.mrb[0].mxu0
  %v801 = vadd.f32 %v148, %v800
  %v802 = vpop.f32.mrb[0].mxu0
  %803 = vmatprep.mubr.f32.mxu0 0.0
  %804 = vmatmul.mubr.f32.gmra.mrb[0].mxu0 %v272
  %v805 = vpop.f32.mrb[0].mxu0
  %v806 = vadd.f32 %v148, %v805
  %v807 = vpop.f32.mrb[0].mxu0
  %808 = vmatprep.mubr.f32.mxu0 0.0
  %809 = vmatmul.mubr.f32.gmra.mrb[0].mxu0 %v275
  %v810 = vpop.f32.mrb[0].mxu0
  %v811 = vadd.f32 %v148, %v810
  %v812 = vpop.f32.mrb[0].mxu0
  %813 = vmatprep.mubr.f32.mxu0 0.0
  %814 = vmatmul.mubr.f32.gmra.mrb[0].mxu0 %v278
  %v815 = vpop.f32.mrb[0].mxu0
  %v816 = vadd.f32 %v148, %v815
  %v817 = vpop.f32.mrb[0].mxu0
  %818 = vmatprep.mubr.f32.mxu0 0.0
  %819 = vmatmul.mubr.f32.gmra.mrb[0].mxu0 %v281
  %v820 = vpop.f32.mrb[0].mxu0
  %v821 = vadd.f32 %v148, %v820
  %v822 = vpop.f32.mrb[0].mxu0
  %823 = vmatprep.mubr.f32.mxu0 0.0
  %824 = vmatmul.mubr.f32.gmra.mrb[0].mxu0 %v284
  %v825 = vpop.f32.mrb[0].mxu0
  %v826 = vadd.f32 %v148, %v825
  %v827 = vpop.f32.mrb[0].mxu0
  %828 = vmatprep.mubr.f32.mxu0 0.0
  %829 = vmatmul.mubr.f32.gmra.mrb[0].mxu0 %v287
  %v830 = vpop.f32.mrb[0].mxu0
  %v831 = vadd.f32 %v148, %v830
  %v832 = vpop.f32.mrb[0].mxu0
  %833 = vmatprep.mubr.f32.mxu0 0.0
  %834 = vmatmul.mubr.f32.gmra.mrb[0].mxu0 %v290
  %v835 = vpop.f32.mrb[0].mxu0
  %v836 = vadd.f32 %v148, %v835
  %v837 = vpop.f32.mrb[0].mxu0
  %838 = vmatprep.mubr.f32.mxu0 0.0
  %839 = vmatmul.mubr.f32.gmra.mrb[0].mxu0 %v293
  %v840 = vpop.f32.mrb[0].mxu0
  %v841 = vadd.f32 %v148, %v840
  %v842 = vpop.f32.mrb[0].mxu0
  %843 = vmatprep.mubr.f32.mxu0 0.0
  %844 = vmatmul.mubr.f32.gmra.mrb[0].mxu0 %v296
  %v845 = vpop.f32.mrb[0].mxu0
  %v846 = vadd.f32 %v148, %v845
  %v847 = vpop.f32.mrb[0].mxu0
  %848 = vmatprep.mubr.f32.mxu0 0.0
  %849 = vmatmul.mubr.f32.gmra.mrb[0].mxu0 %v299
  %v850 = vpop.f32.mrb[0].mxu0
  %v851 = vadd.f32 %v148, %v850
  %v852 = vpop.f32.mrb[0].mxu0
  %853 = vmatprep.mubr.f32.mxu0 0.0
  %854 = vmatmul.mubr.f32.gmra.mrb[0].mxu0 %v302
  %v855 = vpop.f32.mrb[0].mxu0
  %v856 = vadd.f32 %v148, %v855
  %v857 = vpop.f32.mrb[0].mxu0
  %858 = vmatprep.mubr.f32.mxu0 0.0
  %859 = vmatmul.mubr.f32.gmra.mrb[0].mxu0 %v305
  %v860 = vpop.f32.mrb[0].mxu0
  %v861 = vadd.f32 %v148, %v860
  %v862 = vpop.f32.mrb[0].mxu0
  %863 = vmatprep.mubr.f32.mxu0 0.0
  %864 = vmatmul.mubr.f32.gmra.mrb[0].mxu0 %v308
  %v865 = vpop.f32.mrb[0].mxu0
  %v866 = vadd.f32 %v148, %v865
  %v867 = vpop.f32.mrb[0].mxu0
  %868 = vmatprep.mubr.f32.mxu0 0.0
  %869 = vmatmul.mubr.f32.gmra.mrb[0].mxu0 %v311
  %v870 = vpop.f32.mrb[0].mxu0
  %v871 = vadd.f32 %v148, %v870
  %v872 = vpop.f32.mrb[0].mxu0
  %873 = vmatprep.mubr.f32.mxu0 0.0
  %874 = vmatmul.mubr.f32.gmra.mrb[0].mxu0 %v314
  %v875 = vpop.f32.mrb[0].mxu0
  %v876 = vadd.f32 %v148, %v875
  %v877 = vpop.f32.mrb[0].mxu0
  %878 = vmatprep.mubr.f32.mxu0 0.0
  %879 = vmatmul.mubr.f32.gmra.mrb[0].mxu0 %v317
  %v880 = vpop.f32.mrb[0].mxu0
  %v881 = vadd.f32 %v148, %v880
  %v882 = vpop.f32.mrb[0].mxu0
  %883 = vmatprep.mubr.f32.mxu0 0.0
  %884 = vmatmul.mubr.f32.gmra.mrb[0].mxu0 %v320
  %v885 = vpop.f32.mrb[0].mxu0
  %v886 = vadd.f32 %v148, %v885
  %v887 = vpop.f32.mrb[0].mxu0
  %888 = vmatprep.mubr.f32.mxu0 0.0
  %889 = vmatmul.mubr.f32.gmra.mrb[0].mxu0 %v323
  %v890 = vpop.f32.mrb[0].mxu0
  %v891 = vadd.f32 %v148, %v890
  %v892 = vpop.f32.mrb[0].mxu0
  %893 = vmatprep.mubr.f32.mxu0 0.0
  %894 = vmatmul.mubr.f32.gmra.mrb[0].mxu0 %v326
  %v895 = vpop.f32.mrb[0].mxu0
  %v896 = vadd.f32 %v148, %v895
  %v897 = vpop.f32.mrb[0].mxu0
  %898 = vmatprep.mubr.f32.mxu0 0.0
  %899 = vmatmul.mubr.f32.gmra.mrb[0].mxu0 %v329
  %v900 = vpop.f32.mrb[0].mxu0
  %v901 = vadd.f32 %v148, %v900
  %v902 = vpop.f32.mrb[0].mxu0
  %903 = vmatprep.mubr.f32.mxu0 0.0
  %904 = vmatmul.mubr.f32.gmra.mrb[0].mxu0 %v332
  %v905 = vpop.f32.mrb[0].mxu0
  %v906 = vadd.f32 %v148, %v905
  %v907 = vpop.f32.mrb[0].mxu0
  %908 = vmatprep.mubr.f32.mxu0 0.0
  %909 = vmatmul.mubr.f32.gmra.mrb[0].mxu0 %v335
  %v910 = vpop.f32.mrb[0].mxu0
  %v911 = vadd.f32 %v148, %v910
  %v912 = vpop.f32.mrb[0].mxu0
  %913 = vmatprep.mubr.f32.mxu0 0.0
  %914 = vmatmul.mubr.f32.gmra.mrb[0].mxu0 %v338
  %v915 = vpop.f32.mrb[0].mxu0
  %v916 = vadd.f32 %v148, %v915
  %v917 = vpop.f32.mrb[0].mxu0
  %918 = vmatprep.mubr.f32.mxu0 0.0
  %919 = vmatmul.mubr.f32.gmra.mrb[0].mxu0 %v341
  %v920 = vpop.f32.mrb[0].mxu0
  %v921 = vadd.f32 %v148, %v920
  %v922 = vpop.f32.mrb[0].mxu0
  %923 = vmatprep.mubr.f32.mxu0 0.0
  %924 = vmatmul.mubr.f32.gmra.mrb[0].mxu0 %v344
  %v925 = vpop.f32.mrb[0].mxu0
  %v926 = vadd.f32 %v148, %v925
  %v927 = vpop.f32.mrb[0].mxu0
  %928 = vmatprep.mubr.f32.mxu0 0.0
  %929 = vmatmul.mubr.f32.gmra.mrb[0].mxu0 %v347
  %v930 = vpop.f32.mrb[0].mxu0
  %v931 = vadd.f32 %v148, %v930
  %v932 = vpop.f32.mrb[0].mxu0
  %933 = vmatprep.mubr.f32.mxu0 0.0
  %934 = vmatmul.mubr.f32.gmra.mrb[0].mxu0 %v350
  %v935 = vpop.f32.mrb[0].mxu0
  %v936 = vadd.f32 %v148, %v935
  %v937 = vpop.f32.mrb[0].mxu0
  %938 = vmatprep.mubr.f32.mxu0 0.0
  %939 = vmatmul.mubr.f32.gmra.mrb[0].mxu0 %v353
  %v940 = vpop.f32.mrb[0].mxu0
  %v941 = vadd.f32 %v148, %v940
  %v942 = vpop.f32.mrb[0].mxu0
  %943 = vmatprep.mubr.f32.mxu0 0.0
  %944 = vmatmul.mubr.f32.gmra.mrb[0].mxu0 %v356
  %v945 = vpop.f32.mrb[0].mxu0
  %v946 = vadd.f32 %v148, %v945
  %v947 = vpop.f32.mrb[0].mxu0
  %948 = vmatprep.mubr.f32.mxu0 0.0
  %949 = vmatmul.mubr.f32.gmra.mrb[0].mxu0 %v359
  %v950 = vpop.f32.mrb[0].mxu0
  %v951 = vadd.f32 %v148, %v950
  %v952 = vpop.f32.mrb[0].mxu0
  %953 = vmatprep.mubr.f32.mxu0 0.0
  %954 = vmatmul.mubr.f32.gmra.mrb[0].mxu0 %v362
  %v955 = vpop.f32.mrb[0].mxu0
  %v956 = vadd.f32 %v148, %v955
  %v957 = vpop.f32.mrb[0].mxu0
  %958 = vmatprep.mubr.f32.mxu0 0.0
  %959 = vmatmul.mubr.f32.gmra.mrb[0].mxu0 %v365
  %v960 = vpop.f32.mrb[0].mxu0
  %v961 = vadd.f32 %v148, %v960
  %v962 = vpop.f32.mrb[0].mxu0
  %963 = vmatprep.mubr.f32.mxu0 0.0
  %964 = vmatmul.mubr.f32.gmra.mrb[0].mxu0 %v368
  %v965 = vpop.f32.mrb[0].mxu0
  %v966 = vadd.f32 %v148, %v965
  %v967 = vpop.f32.mrb[0].mxu0
  %968 = vmatprep.mubr.f32.mxu0 0.0
  %969 = vmatmul.mubr.f32.gmra.mrb[0].mxu0 %v371
  %v970 = vpop.f32.mrb[0].mxu0
  %v971 = vadd.f32 %v148, %v970
  %v972 = vpop.f32.mrb[0].mxu0
  %973 = vmatprep.mubr.f32.mxu0 0.0
  %974 = vmatmul.mubr.f32.gmra.mrb[0].mxu0 %v374
  %v975 = vpop.f32.mrb[0].mxu0
  %v976 = vadd.f32 %v148, %v975
  %v977 = vpop.f32.mrb[0].mxu0
  %978 = vmatprep.mubr.f32.mxu0 0.0
  %979 = vmatmul.mubr.f32.gmra.mrb[0].mxu0 %v377
  %v980 = vpop.f32.mrb[0].mxu0
  %v981 = vadd.f32 %v148, %v980
  %v982 = vpop.f32.mrb[0].mxu0
  %983 = vmatprep.mubr.f32.mxu0 0.0
  %984 = vmatmul.mubr.f32.gmra.mrb[0].mxu0 %v380
  %v985 = vpop.f32.mrb[0].mxu0
  %v986 = vadd.f32 %v148, %v985
  %v987 = vpop.f32.mrb[0].mxu0
  %988 = vmatprep.mubr.f32.mxu0 0.0
  %989 = vmatmul.mubr.f32.gmra.mrb[0].mxu0 %v383
  %v990 = vpop.f32.mrb[0].mxu0
  %v991 = vadd.f32 %v148, %v990
  %v992 = vpop.f32.mrb[0].mxu0
  %993 = vmatprep.mubr.f32.mxu0 0.0
  %994 = vmatmul.mubr.f32.gmra.mrb[0].mxu0 %v386
  %v995 = vpop.f32.mrb[0].mxu0
  %v996 = vadd.f32 %v148, %v995
  %v997 = vpop.f32.mrb[0].mxu0
  %998 = vmatprep.mubr.f32.mxu0 0.0
  %999 = vmatmul.mubr.f32.gmra.mrb[0].mxu0 %v389
  %v1000 = vpop.f32.mrb[0].mxu0
  %v1001 = vadd.f32 %v148, %v1000
  %v1002 = vpop.f32.mrb[0].mxu0
  %1003 = vmatprep.mubr.f32.mxu0 0.0
  %1004 = vmatmul.mubr.f32.gmra.mrb[0].mxu0 %v392
  %v1005 = vpop.f32.mrb[0].mxu0
  %v1006 = vadd.f32 %v148, %v1005
  %v1007 = vpop.f32.mrb[0].mxu0
  %1008 = vmatprep.mubr.f32.mxu0 0.0
  %1009 = vmatmul.mubr.f32.gmra.mrb[0].mxu0 %v395
  %v1010 = vpop.f32.mrb[0].mxu0
  %v1011 = vadd.f32 %v148, %v1010
  %v1012 = vpop.f32.mrb[0].mxu0
  %1013 = vmatprep.mubr.f32.mxu0 0.0
  %1014 = vmatmul.mubr.f32.gmra.mrb[0].mxu0 %v398
  %v1015 = vpop.f32.mrb[0].mxu0
  %v1016 = vadd.f32 %v148, %v1015
  %v1017 = vpop.f32.mrb[0].mxu0
  %1018 = vmatprep.mubr.f32.mxu0 0.0
  %1019 = vmatmul.mubr.f32.gmra.mrb[0].mxu0 %v401
  %v1020 = vpop.f32.mrb[0].mxu0
  %v1021 = vadd.f32 %v148, %v1020
  %v1022 = vpop.f32.mrb[0].mxu0
  %1023 = vmatprep.mubr.f32.mxu0 0.0
  %1024 = vmatmul.mubr.f32.gmra.mrb[0].mxu0 %v404
  %v1025 = vpop.f32.mrb[0].mxu0
  %v1026 = vadd.f32 %v148, %v1025
  %v1027 = vpop.f32.mrb[0].mxu0
  %1028 = vmatprep.mubr.f32.mxu0 0.0
  %1029 = vmatmul.mubr.f32.gmra.mrb[0].mxu0 %v407
  %v1030 = vpop.f32.mrb[0].mxu0
  %v1031 = vadd.f32 %v148, %v1030
  %v1032 = vpop.f32.mrb[0].mxu0
  %1033 = vmatprep.mubr.f32.mxu0 0.0
  %1034 = vmatmul.mubr.f32.gmra.mrb[0].mxu0 %v410
  %v1035 = vpop.f32.mrb[0].mxu0
  %v1036 = vadd.f32 %v148, %v1035
  %v1037 = vpop.f32.mrb[0].mxu0
  %1038 = vmatprep.mubr.f32.mxu0 0.0
  %1039 = vmatmul.mubr.f32.gmra.mrb[0].mxu0 %v413
  %v1040 = vpop.f32.mrb[0].mxu0
  %v1041 = vadd.f32 %v148, %v1040
  %v1042 = vpop.f32.mrb[0].mxu0
  %1043 = vmatprep.mubr.f32.mxu0 0.0
  %1044 = vmatmul.mubr.f32.gmra.mrb[0].mxu0 %v416
  %v1045 = vpop.f32.mrb[0].mxu0
  %v1046 = vadd.f32 %v148, %v1045
  %v1047 = vpop.f32.mrb[0].mxu0
  %1048 = vmatprep.mubr.f32.mxu0 0.0
  %1049 = vmatmul.mubr.f32.gmra.mrb[0].mxu0 %v419
  %v1050 = vpop.f32.mrb[0].mxu0
  %v1051 = vadd.f32 %v148, %v1050
  %v1052 = vpop.f32.mrb[0].mxu0
  %1053 = vmatprep.mubr.f32.mxu0 0.0
  %1054 = vmatmul.mubr.f32.gmra.mrb[0].mxu0 %v422
  %v1055 = vpop.f32.mrb[0].mxu0
  %v1056 = vadd.f32 %v148, %v1055
  %v1057 = vpop.f32.mrb[0].mxu0
  %1058 = vmatprep.mubr.f32.mxu0 0.0
  %1059 = vmatmul.mubr.f32.gmra.mrb[0].mxu0 %v425
  %v1060 = vpop.f32.mrb[0].mxu0
  %v1061 = vadd.f32 %v148, %v1060
  %v1062 = vpop.f32.mrb[0].mxu0
  %1063 = vmatprep.mubr.f32.mxu0 0.0
  %1064 = vmatmul.mubr.f32.gmra.mrb[0].mxu0 %v428
  %v1065 = vpop.f32.mrb[0].mxu0
  %v1066 = vadd.f32 %v148, %v1065
  %v1067 = vpop.f32.mrb[0].mxu0
  %1068 = vmatprep.mubr.f32.mxu0 0.0
  %1069 = vmatmul.mubr.f32.gmra.mrb[0].mxu0 %v431
  %v1070 = vpop.f32.mrb[0].mxu0
  %v1071 = vadd.f32 %v148, %v1070
  %v1072 = vpop.f32.mrb[0].mxu0
  %1073 = vmatprep.mubr.f32.mxu0 0.0
  %1074 = vmatmul.mubr.f32.gmra.mrb[0].mxu0 %v434
  %v1075 = vpop.f32.mrb[0].mxu0
  %v1076 = vadd.f32 %v148, %v1075
  %v1077 = vpop.f32.mrb[0].mxu0
  %1078 = vmatprep.mubr.f32.mxu0 0.0
  %1079 = vmatmul.mubr.f32.gmra.mrb[0].mxu0 %v437
  %v1080 = vpop.f32.mrb[0].mxu0
  %v1081 = vadd.f32 %v148, %v1080
  %v1082 = vpop.f32.mrb[0].mxu0
  %1083 = vmatprep.mubr.f32.mxu0 0.0
  %1084 = vmatmul.mubr.f32.gmra.mrb[0].mxu0 %v440
  %v1085 = vpop.f32.mrb[0].mxu0
  %v1086 = vadd.f32 %v148, %v1085
  %v1087 = vpop.f32.mrb[0].mxu0
  %1088 = vmatprep.mubr.f32.mxu0 0.0
  %1089 = vmatmul.mubr.f32.gmra.mrb[0].mxu0 %v443
  %v1090 = vpop.f32.mrb[0].mxu0
  %v1091 = vadd.f32 %v148, %v1090
  %v1092 = vpop.f32.mrb[0].mxu0
  %1093 = vmatprep.mubr.f32.mxu0 0.0
  %1094 = vmatmul.mubr.f32.gmra.mrb[0].mxu0 %v446
  %v1095 = vpop.f32.mrb[0].mxu0
  %v1096 = vadd.f32 %v148, %v1095
  %v1097 = vpop.f32.mrb[0].mxu0
  %1098 = vmatprep.mubr.f32.mxu0 0.0
  %1099 = vmatmul.mubr.f32.gmra.mrb[0].mxu0 %v449
  %v1100 = vpop.f32.mrb[0].mxu0
  %v1101 = vadd.f32 %v148, %v1100
  %v1102 = vpop.f32.mrb[0].mxu0
  %1103 = vmatprep.mubr.f32.mxu0 0.0
  %1104 = vmatmul.mubr.f32.gmra.mrb[0].mxu0 %v452
  %v1105 = vpop.f32.mrb[0].mxu0
  %v1106 = vadd.f32 %v148, %v1105
  %v1107 = vpop.f32.mrb[0].mxu0
  %1108 = vmatprep.mubr.f32.mxu0 0.0
  %1109 = vmatmul.mubr.f32.gmra.mrb[0].mxu0 %v455
  %v1110 = vpop.f32.mrb[0].mxu0
  %v1111 = vadd.f32 %v148, %v1110
  %v1112 = vpop.f32.mrb[0].mxu0
  %1113 = vmatprep.mubr.f32.mxu0 0.0
  %1114 = vmatmul.mubr.f32.gmra.mrb[0].mxu0 %v458
  %v1115 = vpop.f32.mrb[0].mxu0
  %v1116 = vadd.f32 %v148, %v1115
  %v1117 = vpop.f32.mrb[0].mxu0
  %1118 = vmatprep.mubr.f32.mxu0 0.0
  %1119 = vmatmul.mubr.f32.gmra.mrb[0].mxu0 %v461
  %v1120 = vpop.f32.mrb[0].mxu0
  %v1121 = vadd.f32 %v148, %v1120
  %v1122 = vpop.f32.mrb[0].mxu0
  %1123 = vmatprep.mubr.f32.mxu0 0.0
  %1124 = vmatmul.mubr.f32.gmra.mrb[0].mxu0 %v464
  %v1125 = vpop.f32.mrb[0].mxu0
  %v1126 = vadd.f32 %v148, %v1125
  %v1127 = vpop.f32.mrb[0].mxu0
  %1128 = vmatprep.mubr.f32.mxu0 0.0
  %1129 = vmatmul.mubr.f32.gmra.mrb[0].mxu0 %v467
  %v1130 = vpop.f32.mrb[0].mxu0
  %v1131 = vadd.f32 %v148, %v1130
  %v1132 = vpop.f32.mrb[0].mxu0
  %1133 = vmatprep.mubr.f32.mxu0 0.0
  %1134 = vmatmul.mubr.f32.gmra.mrb[0].mxu0 %v470
  %v1135 = vpop.f32.mrb[0].mxu0
  %v1136 = vadd.f32 %v148, %v1135
  %v1137 = vpop.f32.mrb[0].mxu0
  %1138 = vmatprep.mubr.f32.mxu0 0.0
  %1139 = vmatmul.mubr.f32.gmra.mrb[0].mxu0 %v473
  %v1140 = vpop.f32.mrb[0].mxu0
  %v1141 = vadd.f32 %v148, %v1140
  %v1142 = vpop.f32.mrb[0].mxu0
  %1143 = vmatprep.mubr.f32.mxu0 0.0
  %1144 = vmatmul.mubr.f32.gmra.mrb[0].mxu0 %v476
  %v1145 = vpop.f32.mrb[0].mxu0
  %v1146 = vadd.f32 %v148, %v1145
  %v1147 = vpop.f32.mrb[0].mxu0
  %1148 = vmatprep.mubr.f32.mxu0 0.0
  %1149 = vmatmul.mubr.f32.gmra.mrb[0].mxu0 %v479
  %v1150 = vpop.f32.mrb[0].mxu0
  %v1151 = vadd.f32 %v148, %v1150
  %v1152 = vpop.f32.mrb[0].mxu0
  %1153 = vmatprep.mubr.f32.mxu0 0.0
  %1154 = vmatmul.mubr.f32.gmra.mrb[0].mxu0 %v482
  %v1155 = vpop.f32.mrb[0].mxu0
  %v1156 = vadd.f32 %v148, %v1155
  %v1157 = vpop.f32.mrb[0].mxu0
  %1158 = vmatprep.mubr.f32.mxu0 0.0
  %1159 = vmatmul.mubr.f32.gmra.mrb[0].mxu0 %v485
  %v1160 = vpop.f32.mrb[0].mxu0
  %v1161 = vadd.f32 %v148, %v1160
  %v1162 = vpop.f32.mrb[0].mxu0
  %1163 = vmatprep.mubr.f32.mxu0 0.0
  %1164 = vmatmul.mubr.f32.gmra.mrb[0].mxu0 %v488
  %v1165 = vpop.f32.mrb[0].mxu0
  %v1166 = vadd.f32 %v148, %v1165
  %v1167 = vpop.f32.mrb[0].mxu0
  %1168 = vmatprep.mubr.f32.mxu0 0.0
  %1169 = vmatmul.mubr.f32.gmra.mrb[0].mxu0 %v491
  %v1170 = vpop.f32.mrb[0].mxu0
  %v1171 = vadd.f32 %v148, %v1170
  %v1172 = vpop.f32.mrb[0].mxu0
  %1173 = vmatprep.mubr.f32.mxu0 0.0
  %1174 = vmatmul.mubr.f32.gmra.mrb[0].mxu0 %v494
  %v1175 = vpop.f32.mrb[0].mxu0
  %v1176 = vadd.f32 %v148, %v1175
  %v1177 = vpop.f32.mrb[0].mxu0
  %1178 = vmatprep.mubr.f32.mxu0 0.0
  %1179 = vmatmul.mubr.f32.gmra.mrb[0].mxu0 %v497
  %v1180 = vpop.f32.mrb[0].mxu0
  %v1181 = vadd.f32 %v148, %v1180
  %v1182 = vpop.f32.mrb[0].mxu0
  %1183 = vmatprep.mubr.f32.mxu0 0.0
  %1184 = vmatmul.mubr.f32.gmra.mrb[0].mxu0 %v500
  %v1185 = vpop.f32.mrb[0].mxu0
  %v1186 = vadd.f32 %v148, %v1185
  %v1187 = vpop.f32.mrb[0].mxu0
  %1188 = vmatprep.mubr.f32.mxu0 0.0
  %1189 = vmatmul.mubr.f32.gmra.mrb[0].mxu0 %v503
  %v1190 = vpop.f32.mrb[0].mxu0
  %v1191 = vadd.f32 %v148, %v1190
  %v1192 = vpop.f32.mrb[0].mxu0
  %1193 = vmatprep.mubr.f32.mxu0 0.0
  %1194 = vmatmul.mubr.f32.gmra.mrb[0].mxu0 %v506
  %v1195 = vpop.f32.mrb[0].mxu0
  %v1196 = vadd.f32 %v148, %v1195
  %v1197 = vpop.f32.mrb[0].mxu0
  %1198 = vmatprep.mubr.f32.mxu0 0.0
  %1199 = vmatmul.mubr.f32.gmra.mrb[0].mxu0 %v509
  %v1200 = vpop.f32.mrb[0].mxu0
  %v1201 = vadd.f32 %v148, %v1200
  %v1202 = vpop.f32.mrb[0].mxu0
  %1203 = vmatprep.mubr.f32.mxu0 0.0
  %1204 = vmatmul.mubr.f32.gmra.mrb[0].mxu0 %v512
  %v1205 = vpop.f32.mrb[0].mxu0
  %v1206 = vadd.f32 %v148, %v1205
  %v1207 = vpop.f32.mrb[0].mxu0
  %1208 = vmatprep.mubr.f32.mxu0 0.0
  %1209 = vmatmul.mubr.f32.gmra.mrb[0].mxu0 %v515
  %v1210 = vpop.f32.mrb[0].mxu0
  %v1211 = vadd.f32 %v148, %v1210
  %v1212 = vpop.f32.mrb[0].mxu0
  %1213 = vmatprep.mubr.f32.mxu0 0.0
  %1214 = vmatmul.mubr.f32.gmra.mrb[0].mxu0 %v518
  %v1215 = vpop.f32.mrb[0].mxu0
  %v1216 = vadd.f32 %v148, %v1215
  %v1217 = vpop.f32.mrb[0].mxu0
  %1218 = vmatprep.mubr.f32.mxu0 0.0
  %1219 = vmatmul.mubr.f32.gmra.mrb[0].mxu0 %v521
  %v1220 = vpop.f32.mrb[0].mxu0
  %v1221 = vadd.f32 %v148, %v1220
  %v1222 = vpop.f32.mrb[0].mxu0
  %1223 = vmatprep.mubr.f32.mxu0 0.0
  %1224 = vmatmul.mubr.f32.gmra.mrb[0].mxu0 %v524
  %v1225 = vpop.f32.mrb[0].mxu0
  %v1226 = vadd.f32 %v148, %v1225
  %v1227 = vpop.f32.mrb[0].mxu0
  %1228 = vmatprep.mubr.f32.mxu0 0.0
  %1229 = vmatmul.mubr.f32.gmra.mrb[0].mxu0 %v527
  %v1230 = vpop.f32.mrb[0].mxu0
  %v1231 = vadd.f32 %v148, %v1230
  %v1232 = vpop.f32.mrb[0].mxu0
  %1233 = vmatprep.mubr.f32.mxu0 0.0
  %1234 = vmatmul.mubr.f32.gmra.mrb[0].mxu0 %v530
  %v1235 = vpop.f32.mrb[0].mxu0
  %v1236 = vadd.f32 %v148, %v1235
  %v1237 = vpop.f32.mrb[0].mxu0
  %1238 = vmatprep.mubr.f32.mxu0 0.0
  %1239 = vmatmul.mubr.f32.gmra.mrb[0].mxu0 %v533
  %v1240 = vpop.f32.mrb[0].mxu0
  %v1241 = vadd.f32 %v148, %v1240
  %v1242 = vpop.f32.mrb[0].mxu0
  %1243 = vdwg.mxu0
  %1244 = vst.msk [vmem:[%s3] sm:$0xff] %vm150, %v606
  %1245 = vst.msk [vmem:[%s3 + $0x8] sm:$0xff] %vm150, %v611
  %1246 = vst.msk [vmem:[%s3 + $0x10] sm:$0xff] %vm150, %v616
  %1247 = vst.msk [vmem:[%s3 + $0x18] sm:$0xff] %vm150, %v621
  %1248 = vst.msk [vmem:[%s3 + $0x20] sm:$0xff] %vm150, %v626
  %1249 = vst.msk [vmem:[%s3 + $0x28] sm:$0xff] %vm150, %v631
  %1250 = vst.msk [vmem:[%s3 + $0x30] sm:$0xff] %vm150, %v636
  %1251 = vst.msk [vmem:[%s3 + $0x38] sm:$0xff] %vm150, %v641
  %1252 = vst.msk [vmem:[%s3 + $0x40] sm:$0xff] %vm150, %v646
  %1253 = vst.msk [vmem:[%s3 + $0x48] sm:$0xff] %vm150, %v651
  %1254 = vst.msk [vmem:[%s3 + $0x50] sm:$0xff] %vm150, %v656
  %1255 = vst.msk [vmem:[%s3 + $0x58] sm:$0xff] %vm150, %v661
  %1256 = vst.msk [vmem:[%s3 + $0x60] sm:$0xff] %vm150, %v666
  %1257 = vst.msk [vmem:[%s3 + $0x68] sm:$0xff] %vm150, %v671
  %1258 = vst.msk [vmem:[%s3 + $0x70] sm:$0xff] %vm150, %v676
  %1259 = vst.msk [vmem:[%s3 + $0x78] sm:$0xff] %vm150, %v681
  %1260 = vst.msk [vmem:[%s3 + $0x80] sm:$0xff] %vm150, %v686
  %1261 = vst.msk [vmem:[%s3 + $0x88] sm:$0xff] %vm150, %v691
  %1262 = vst.msk [vmem:[%s3 + $0x90] sm:$0xff] %vm150, %v696
  %1263 = vst.msk [vmem:[%s3 + $0x98] sm:$0xff] %vm150, %v701
  %1264 = vst.msk [vmem:[%s3 + $0xa0] sm:$0xff] %vm150, %v706
  %1265 = vst.msk [vmem:[%s3 + $0xa8] sm:$0xff] %vm150, %v711
  %1266 = vst.msk [vmem:[%s3 + $0xb0] sm:$0xff] %vm150, %v716
  %1267 = vst.msk [vmem:[%s3 + $0xb8] sm:$0xff] %vm150, %v721
  %1268 = vst.msk [vmem:[%s3 + $0xc0] sm:$0xff] %vm150, %v726
  %1269 = vst.msk [vmem:[%s3 + $0xc8] sm:$0xff] %vm150, %v731
  %1270 = vst.msk [vmem:[%s3 + $0xd0] sm:$0xff] %vm150, %v736
  %1271 = vst.msk [vmem:[%s3 + $0xd8] sm:$0xff] %vm150, %v741
  %1272 = vst.msk [vmem:[%s3 + $0xe0] sm:$0xff] %vm150, %v746
  %1273 = vst.msk [vmem:[%s3 + $0xe8] sm:$0xff] %vm150, %v751
  %1274 = vst.msk [vmem:[%s3 + $0xf0] sm:$0xff] %vm150, %v756
  %1275 = vst.msk [vmem:[%s3 + $0xf8] sm:$0xff] %vm150, %v761
  %1276 = vst.msk [vmem:[%s3 + $0x100] sm:$0xff] %vm150, %v766
  %1277 = vst.msk [vmem:[%s3 + $0x108] sm:$0xff] %vm150, %v771
  %1278 = vst.msk [vmem:[%s3 + $0x110] sm:$0xff] %vm150, %v776
  %1279 = vst.msk [vmem:[%s3 + $0x118] sm:$0xff] %vm150, %v781
  %1280 = vst.msk [vmem:[%s3 + $0x120] sm:$0xff] %vm150, %v786
  %1281 = vst.msk [vmem:[%s3 + $0x128] sm:$0xff] %vm150, %v791
  %1282 = vst.msk [vmem:[%s3 + $0x130] sm:$0xff] %vm150, %v796
  %1283 = vst.msk [vmem:[%s3 + $0x138] sm:$0xff] %vm150, %v801
  %1284 = vst.msk [vmem:[%s3 + $0x140] sm:$0xff] %vm150, %v806
  %1285 = vst.msk [vmem:[%s3 + $0x148] sm:$0xff] %vm150, %v811
  %1286 = vst.msk [vmem:[%s3 + $0x150] sm:$0xff] %vm150, %v816
  %1287 = vst.msk [vmem:[%s3 + $0x158] sm:$0xff] %vm150, %v821
  %1288 = vst.msk [vmem:[%s3 + $0x160] sm:$0xff] %vm150, %v826
  %1289 = vst.msk [vmem:[%s3 + $0x168] sm:$0xff] %vm150, %v831
  %1290 = vst.msk [vmem:[%s3 + $0x170] sm:$0xff] %vm150, %v836
  %1291 = vst.msk [vmem:[%s3 + $0x178] sm:$0xff] %vm150, %v841
  %1292 = vst.msk [vmem:[%s3 + $0x180] sm:$0xff] %vm150, %v846
  %1293 = vst.msk [vmem:[%s3 + $0x188] sm:$0xff] %vm150, %v851
  %1294 = vst.msk [vmem:[%s3 + $0x190] sm:$0xff] %vm150, %v856
  %1295 = vst.msk [vmem:[%s3 + $0x198] sm:$0xff] %vm150, %v861
  %1296 = vst.msk [vmem:[%s3 + $0x1a0] sm:$0xff] %vm150, %v866
  %1297 = vst.msk [vmem:[%s3 + $0x1a8] sm:$0xff] %vm150, %v871
  %1298 = vst.msk [vmem:[%s3 + $0x1b0] sm:$0xff] %vm150, %v876
  %1299 = vst.msk [vmem:[%s3 + $0x1b8] sm:$0xff] %vm150, %v881
  %1300 = vst.msk [vmem:[%s3 + $0x1c0] sm:$0xff] %vm150, %v886
  %1301 = vst.msk [vmem:[%s3 + $0x1c8] sm:$0xff] %vm150, %v891
  %1302 = vst.msk [vmem:[%s3 + $0x1d0] sm:$0xff] %vm150, %v896
  %1303 = vst.msk [vmem:[%s3 + $0x1d8] sm:$0xff] %vm150, %v901
  %1304 = vst.msk [vmem:[%s3 + $0x1e0] sm:$0xff] %vm150, %v906
  %1305 = vst.msk [vmem:[%s3 + $0x1e8] sm:$0xff] %vm150, %v911
  %1306 = vst.msk [vmem:[%s3 + $0x1f0] sm:$0xff] %vm150, %v916
  %1307 = vst.msk [vmem:[%s3 + $0x1f8] sm:$0xff] %vm150, %v921
  %1308 = vst.msk [vmem:[%s3 + $0x200] sm:$0xff] %vm150, %v926
  %1309 = vst.msk [vmem:[%s3 + $0x208] sm:$0xff] %vm150, %v931
  %1310 = vst.msk [vmem:[%s3 + $0x210] sm:$0xff] %vm150, %v936
  %1311 = vst.msk [vmem:[%s3 + $0x218] sm:$0xff] %vm150, %v941
  %1312 = vst.msk [vmem:[%s3 + $0x220] sm:$0xff] %vm150, %v946
  %1313 = vst.msk [vmem:[%s3 + $0x228] sm:$0xff] %vm150, %v951
  %1314 = vst.msk [vmem:[%s3 + $0x230] sm:$0xff] %vm150, %v956
  %1315 = vst.msk [vmem:[%s3 + $0x238] sm:$0xff] %vm150, %v961
  %1316 = vst.msk [vmem:[%s3 + $0x240] sm:$0xff] %vm150, %v966
  %1317 = vst.msk [vmem:[%s3 + $0x248] sm:$0xff] %vm150, %v971
  %1318 = vst.msk [vmem:[%s3 + $0x250] sm:$0xff] %vm150, %v976
  %1319 = vst.msk [vmem:[%s3 + $0x258] sm:$0xff] %vm150, %v981
  %1320 = vst.msk [vmem:[%s3 + $0x260] sm:$0xff] %vm150, %v986
  %1321 = vst.msk [vmem:[%s3 + $0x268] sm:$0xff] %vm150, %v991
  %1322 = vst.msk [vmem:[%s3 + $0x270] sm:$0xff] %vm150, %v996
  %1323 = vst.msk [vmem:[%s3 + $0x278] sm:$0xff] %vm150, %v1001
  %1324 = vst.msk [vmem:[%s3 + $0x280] sm:$0xff] %vm150, %v1006
  %1325 = vst.msk [vmem:[%s3 + $0x288] sm:$0xff] %vm150, %v1011
  %1326 = vst.msk [vmem:[%s3 + $0x290] sm:$0xff] %vm150, %v1016
  %1327 = vst.msk [vmem:[%s3 + $0x298] sm:$0xff] %vm150, %v1021
  %1328 = vst.msk [vmem:[%s3 + $0x2a0] sm:$0xff] %vm150, %v1026
  %1329 = vst.msk [vmem:[%s3 + $0x2a8] sm:$0xff] %vm150, %v1031
  %1330 = vst.msk [vmem:[%s3 + $0x2b0] sm:$0xff] %vm150, %v1036
  %1331 = vst.msk [vmem:[%s3 + $0x2b8] sm:$0xff] %vm150, %v1041
  %1332 = vst.msk [vmem:[%s3 + $0x2c0] sm:$0xff] %vm150, %v1046
  %1333 = vst.msk [vmem:[%s3 + $0x2c8] sm:$0xff] %vm150, %v1051
  %1334 = vst.msk [vmem:[%s3 + $0x2d0] sm:$0xff] %vm150, %v1056
  %1335 = vst.msk [vmem:[%s3 + $0x2d8] sm:$0xff] %vm150, %v1061
  %1336 = vst.msk [vmem:[%s3 + $0x2e0] sm:$0xff] %vm150, %v1066
  %1337 = vst.msk [vmem:[%s3 + $0x2e8] sm:$0xff] %vm150, %v1071
  %1338 = vst.msk [vmem:[%s3 + $0x2f0] sm:$0xff] %vm150, %v1076
  %1339 = vst.msk [vmem:[%s3 + $0x2f8] sm:$0xff] %vm150, %v1081
  %1340 = vst.msk [vmem:[%s3 + $0x300] sm:$0xff] %vm150, %v1086
  %1341 = vst.msk [vmem:[%s3 + $0x308] sm:$0xff] %vm150, %v1091
  %1342 = vst.msk [vmem:[%s3 + $0x310] sm:$0xff] %vm150, %v1096
  %1343 = vst.msk [vmem:[%s3 + $0x318] sm:$0xff] %vm150, %v1101
  %1344 = vst.msk [vmem:[%s3 + $0x320] sm:$0xff] %vm150, %v1106
  %1345 = vst.msk [vmem:[%s3 + $0x328] sm:$0xff] %vm150, %v1111
  %1346 = vst.msk [vmem:[%s3 + $0x330] sm:$0xff] %vm150, %v1116
  %1347 = vst.msk [vmem:[%s3 + $0x338] sm:$0xff] %vm150, %v1121
  %1348 = vst.msk [vmem:[%s3 + $0x340] sm:$0xff] %vm150, %v1126
  %1349 = vst.msk [vmem:[%s3 + $0x348] sm:$0xff] %vm150, %v1131
  %1350 = vst.msk [vmem:[%s3 + $0x350] sm:$0xff] %vm150, %v1136
  %1351 = vst.msk [vmem:[%s3 + $0x358] sm:$0xff] %vm150, %v1141
  %1352 = vst.msk [vmem:[%s3 + $0x360] sm:$0xff] %vm150, %v1146
  %1353 = vst.msk [vmem:[%s3 + $0x368] sm:$0xff] %vm150, %v1151
  %1354 = vst.msk [vmem:[%s3 + $0x370] sm:$0xff] %vm150, %v1156
  %1355 = vst.msk [vmem:[%s3 + $0x378] sm:$0xff] %vm150, %v1161
  %1356 = vst.msk [vmem:[%s3 + $0x380] sm:$0xff] %vm150, %v1166
  %1357 = vst.msk [vmem:[%s3 + $0x388] sm:$0xff] %vm150, %v1171
  %1358 = vst.msk [vmem:[%s3 + $0x390] sm:$0xff] %vm150, %v1176
  %1359 = vst.msk [vmem:[%s3 + $0x398] sm:$0xff] %vm150, %v1181
  %1360 = vst.msk [vmem:[%s3 + $0x3a0] sm:$0xff] %vm150, %v1186
  %1361 = vst.msk [vmem:[%s3 + $0x3a8] sm:$0xff] %vm150, %v1191
  %1362 = vst.msk [vmem:[%s3 + $0x3b0] sm:$0xff] %vm150, %v1196
  %1363 = vst.msk [vmem:[%s3 + $0x3b8] sm:$0xff] %vm150, %v1201
  %1364 = vst.msk [vmem:[%s3 + $0x3c0] sm:$0xff] %vm150, %v1206
  %1365 = vst.msk [vmem:[%s3 + $0x3c8] sm:$0xff] %vm150, %v1211
  %1366 = vst.msk [vmem:[%s3 + $0x3d0] sm:$0xff] %vm150, %v1216
  %1367 = vst.msk [vmem:[%s3 + $0x3d8] sm:$0xff] %vm150, %v1221
  %1368 = vst.msk [vmem:[%s3 + $0x3e0] sm:$0xff] %vm150, %v1226
  %1369 = vst.msk [vmem:[%s3 + $0x3e8] sm:$0xff] %vm150, %v1231
  %1370 = vst.msk [vmem:[%s3 + $0x3f0] sm:$0xff] %vm150, %v1236
  %1371 = vst.msk [vmem:[%s3 + $0x3f8] sm:$0xff] %vm150, %v1241
  // Predicated region
  $region14: #{tpu_custom_call.1} parent=0 // pred_check
    _
  $region15: #{tpu_custom_call.1} parent=0 // pred_check_branch
    %1373 = sbr.rel (0) target = $region17
  $region16: #{tpu_custom_call.1} parent=0 // pred_region
    _
  $region17: #{tpu_custom_call.1} parent=0 // pred_fallthru
    _
  // Predicated region
  $region18: #{tpu_custom_call.1} parent=0 // pred_check
    _
  $region19: #{tpu_custom_call.1} parent=0 // pred_check_branch
    %1375 = sbr.rel (0) target = $region21
  $region20: #{tpu_custom_call.1} parent=0 // pred_region
    _
  $region21: #{tpu_custom_call.1} parent=0 // pred_fallthru
    _

</llo_original>
